<compile_context>
chip_gen: v6e
topology: v6e:2x2x1
jax: 0.10.0
libtpu: 0.0.40
codegen_flags: <defaults>
</compile_context>

<pallas_src>
import jax
import jax.numpy as jnp
from jax import lax
from jax.experimental import pallas as pl
from jax.experimental.pallas import tpu as pltpu

# Problem sizes (small, CIFAR-style conv layer)
N = 2          # batch
C_IN = 4       # in_channels
C_OUT = 8      # out_channels
R_IN = 3       # Tucker rank_in  (compress output channels)
R_OUT = 5      # Tucker rank_out (core output channels)
KH = KW = 3    # kernel_size
STRIDE = 1     # kernel below assumes stride=1
PAD = 1        # padding
DILATION = 1   # kernel below assumes dilation=1
GROUPS = 1     # kernel below assumes groups=1 (standard conv)
H = W = 16     # spatial

HP = H + 2 * PAD                        # padded height
WP = W + 2 * PAD                        # padded width
S_REAL = N * HP * WP                    # flattened (batch, padded spatial) length
S_PAD = ((S_REAL + 127) // 128) * 128   # lane-dense flat length (648 -> 768)

N_TAPS = KH * KW
W_ROWS = N_TAPS * C_OUT + C_OUT         # 9 taps * C_OUT rows + C_OUT bias rows = 80


def tucker_kernel(xp_ref, w_ref, o_ref):
    """Single-invocation collapsed Tucker block (== one KxK conv + bias).

    xp_ref: (C_IN, S_PAD)   pre-padded input, flat index = n*HP*WP + h*WP + w
    w_ref : (W_ROWS, C_IN)  rows [t*C_OUT:(t+1)*C_OUT] = combined weight of tap
                            t = kh*KW+kw as a (C_OUT, C_IN) matrix;
                            rows [N_TAPS*C_OUT:], column 0 = bias.
    o_ref : (C_OUT, S_PAD)  output in flat padded coordinates
    """
    xp = xp_ref[...]                                          # (C_IN, S_PAD)
    s_len = xp.shape[1]

    # KxK conv in flat padded coords; tap (kh,kw) == constant lane shift.
    acc = None
    for kh in range(KH):
        for kw in range(KW):
            t = kh * KW + kw
            off = kh * WP + kw
            # result[s] = xp[s + off]; rolled-in garbage only lands in
            # positions that the wrapper discards.
            tap = xp if off == 0 else pltpu.roll(xp, shift=s_len - off, axis=1)
            wt = w_ref[t * C_OUT:(t + 1) * C_OUT, :]          # (C_OUT, C_IN), tile-aligned slice
            part = jnp.dot(wt, tap, preferred_element_type=jnp.float32)
            acc = part if acc is None else acc + part         # init from first tap

    bias = w_ref[N_TAPS * C_OUT:N_TAPS * C_OUT + C_OUT, 0:1]  # (C_OUT, 1)
    o_ref[...] = (acc + bias).astype(o_ref.dtype)             # lane-dense unmasked store


def tucker_forward(x_nchw, w_compress, w_core, w_restore, bias):
    """x_nchw: (N, C_IN, H, W). Returns (N, C_OUT, H, W)."""
    # Kernel assumes these module config values (would silently be wrong otherwise).
    assert STRIDE == 1 and DILATION == 1 and GROUPS == 1
    n, cin, h, w = x_nchw.shape
    assert (n, cin, h, w) == (N, C_IN, H, W)

    # --- collapse the linear Tucker chain into one combined conv weight ---
    wd = w_compress.reshape(R_IN, C_IN)                       # (R_IN, C_IN)
    wr = w_restore.reshape(C_OUT, R_OUT)                      # (C_OUT, R_OUT)
    # combined[co,ci,kh,kw] = sum_{ro,ri} wr[co,ro] * w_core[ro,ri,kh,kw] * wd[ri,ci]
    w_full = jnp.einsum('pr,rshw,sc->pchw', wr, w_core, wd)   # (C_OUT, C_IN, KH, KW)

    # Pack the 9 per-tap (C_OUT, C_IN) slabs + bias into ONE array -> 1 weight DMA.
    w_taps = jnp.transpose(w_full, (2, 3, 0, 1)).reshape(N_TAPS * C_OUT, C_IN)
    b_rows = jnp.zeros((C_OUT, C_IN), jnp.float32).at[:, 0].set(bias.astype(jnp.float32))
    wpack = jnp.concatenate([w_taps.astype(jnp.float32), b_rows], axis=0)   # (80, C_IN)

    # --- input layout: spatial pre-pad, channels-first, flat lane-padded ---
    xpad = jnp.pad(x_nchw, ((0, 0), (0, 0), (PAD, PAD), (PAD, PAD)))        # (N,C,HP,WP)
    xflat = jnp.transpose(xpad, (1, 0, 2, 3)).reshape(cin, n * HP * WP)
    xflat = jnp.pad(xflat, ((0, 0), (0, S_PAD - n * HP * WP))).astype(jnp.float32)

    out_flat = pl.pallas_call(
        tucker_kernel,
        out_shape=jax.ShapeDtypeStruct((C_OUT, S_PAD), jnp.float32),
        grid=(1,),
        in_specs=[
            pl.BlockSpec((C_IN, S_PAD), lambda i: (0, 0)),
            pl.BlockSpec((W_ROWS, C_IN), lambda i: (0, 0)),
        ],
        out_specs=pl.BlockSpec((C_OUT, S_PAD), lambda i: (0, 0)),
        compiler_params=pltpu.CompilerParams(
            dimension_semantics=("arbitrary",)),
    )(xflat, wpack)

    # Extract valid output pixels (flat padded coords -> NCHW) in XLA.
    out = out_flat[:, :n * HP * WP].reshape(C_OUT, n, HP, WP)[:, :, :H, :W]
    return jnp.transpose(out, (1, 0, 2, 3)).astype(x_nchw.dtype)


def reference_forward(x_nchw, w_compress, w_core, w_restore, bias):
    """Pure-JAX (lax.conv) reference of the same Tucker block, NCHW."""
    dn = ("NCHW", "OIHW", "NCHW")
    y = lax.conv_general_dilated(x_nchw, w_compress, (1, 1), "VALID",
                                 dimension_numbers=dn)
    y = lax.conv_general_dilated(y, w_core, (STRIDE, STRIDE),
                                 ((PAD, PAD), (PAD, PAD)),
                                 dimension_numbers=dn,
                                 feature_group_count=GROUPS)
    y = lax.conv_general_dilated(y, w_restore, (1, 1), "VALID",
                                 dimension_numbers=dn)
    return y + bias.reshape(1, C_OUT, 1, 1)


if __name__ == "__main__":
    key = jax.random.PRNGKey(0)
    kx, k1, k2, k3, k4 = jax.random.split(key, 5)

    # Deterministic synthetic factorized parameters (shapes from TuckerBlock.__init__).
    # TODO(synk): the tensorly partial_tucker / VBMF rank selection is host-side
    # preprocessing with no Pallas equivalent; the kernel consumes already-factorized weights.
    x = jax.random.normal(kx, (N, C_IN, H, W), jnp.float32)
    w_compress = jax.random.normal(k1, (R_IN, C_IN, 1, 1), jnp.float32) * 0.3
    w_core = jax.random.normal(k2, (R_OUT, R_IN, KH, KW), jnp.float32) * 0.2
    w_restore = jax.random.normal(k3, (C_OUT, R_OUT, 1, 1), jnp.float32) * 0.3
    bias = jax.random.normal(k4, (C_OUT,), jnp.float32) * 0.1

    out = tucker_forward(x, w_compress, w_core, w_restore, bias)
    out = jax.block_until_ready(out)

    ref = reference_forward(x, w_compress, w_core, w_restore, bias)
    assert out.shape == (N, C_OUT, H, W)
    assert jnp.allclose(out, ref, atol=1e-3, rtol=1e-3), "mismatch vs reference"

    print("KERNEL_OK")
</pallas_src>

<mosaic_0001>
module attributes {stable_mosaic.version = 11 : i64} {
  func.func @tucker_kernel(%arg0: i32, %arg1: memref<4x768xf32, #tpu.memory_space<vmem>>, %arg2: memref<80x4xf32, #tpu.memory_space<vmem>>, %arg3: memref<8x768xf32, #tpu.memory_space<vmem>>) attributes {dimension_semantics = [#tpu.dimension_semantics<arbitrary>], iteration_bounds = array<i64: 1>, scalar_prefetch = 0 : i64, scratch_operands = 0 : i64, tpu.core_type = #tpu.core_type<tc>, window_params = [{pipeline_mode = #tpu.pipeline_mode<synchronous>, transform_indices = @transform_0, window_bounds = array<i64: 4, 768>}, {pipeline_mode = #tpu.pipeline_mode<synchronous>, transform_indices = @transform_1, window_bounds = array<i64: 80, 4>}, {pipeline_mode = #tpu.pipeline_mode<synchronous>, transform_indices = @transform_2, window_bounds = array<i64: 8, 768>}]} {
    %c0 = arith.constant 0 : index
    %c0_0 = arith.constant 0 : index
    %0 = vector.load %arg1[%c0, %c0_0] : memref<4x768xf32, #tpu.memory_space<vmem>>, vector<4x768xf32>
    %c0_1 = arith.constant 0 : index
    %c0_2 = arith.constant 0 : index
    %1 = vector.load %arg2[%c0_1, %c0_2] : memref<80x4xf32, #tpu.memory_space<vmem>>, vector<8x4xf32>
    %cst = arith.constant dense<0.000000e+00> : vector<8x768xf32>
    %2 = tpu.matmul %1, %0, %cst {dimension_numbers = #tpu.dot_dimension_numbers<[1], [0], [0], [1], [0, 0, 1, 1], [], []>} : vector<8x4xf32>, vector<4x768xf32>, vector<8x768xf32> -> vector<8x768xf32>
    %c767_i32 = arith.constant 767 : i32
    %3 = tpu.dynamic_rotate %0 by %c767_i32 dim 1 : vector<4x768xf32>, i32 -> vector<4x768xf32>
    %c8 = arith.constant 8 : index
    %c0_3 = arith.constant 0 : index
    %4 = vector.load %arg2[%c8, %c0_3] : memref<80x4xf32, #tpu.memory_space<vmem>>, vector<8x4xf32>
    %cst_4 = arith.constant dense<0.000000e+00> : vector<8x768xf32>
    %5 = tpu.matmul %4, %3, %cst_4 {dimension_numbers = #tpu.dot_dimension_numbers<[1], [0], [0], [1], [0, 0, 1, 1], [], []>} : vector<8x4xf32>, vector<4x768xf32>, vector<8x768xf32> -> vector<8x768xf32>
    %6 = arith.addf %2, %5 : vector<8x768xf32>
    %c766_i32 = arith.constant 766 : i32
    %7 = tpu.dynamic_rotate %0 by %c766_i32 dim 1 : vector<4x768xf32>, i32 -> vector<4x768xf32>
    %c16 = arith.constant 16 : index
    %c0_5 = arith.constant 0 : index
    %8 = vector.load %arg2[%c16, %c0_5] : memref<80x4xf32, #tpu.memory_space<vmem>>, vector<8x4xf32>
    %cst_6 = arith.constant dense<0.000000e+00> : vector<8x768xf32>
    %9 = tpu.matmul %8, %7, %cst_6 {dimension_numbers = #tpu.dot_dimension_numbers<[1], [0], [0], [1], [0, 0, 1, 1], [], []>} : vector<8x4xf32>, vector<4x768xf32>, vector<8x768xf32> -> vector<8x768xf32>
    %10 = arith.addf %6, %9 : vector<8x768xf32>
    %c750_i32 = arith.constant 750 : i32
    %11 = tpu.dynamic_rotate %0 by %c750_i32 dim 1 : vector<4x768xf32>, i32 -> vector<4x768xf32>
    %c24 = arith.constant 24 : index
    %c0_7 = arith.constant 0 : index
    %12 = vector.load %arg2[%c24, %c0_7] : memref<80x4xf32, #tpu.memory_space<vmem>>, vector<8x4xf32>
    %cst_8 = arith.constant dense<0.000000e+00> : vector<8x768xf32>
    %13 = tpu.matmul %12, %11, %cst_8 {dimension_numbers = #tpu.dot_dimension_numbers<[1], [0], [0], [1], [0, 0, 1, 1], [], []>} : vector<8x4xf32>, vector<4x768xf32>, vector<8x768xf32> -> vector<8x768xf32>
    %14 = arith.addf %10, %13 : vector<8x768xf32>
    %c749_i32 = arith.constant 749 : i32
    %15 = tpu.dynamic_rotate %0 by %c749_i32 dim 1 : vector<4x768xf32>, i32 -> vector<4x768xf32>
    %c32 = arith.constant 32 : index
    %c0_9 = arith.constant 0 : index
    %16 = vector.load %arg2[%c32, %c0_9] : memref<80x4xf32, #tpu.memory_space<vmem>>, vector<8x4xf32>
    %cst_10 = arith.constant dense<0.000000e+00> : vector<8x768xf32>
    %17 = tpu.matmul %16, %15, %cst_10 {dimension_numbers = #tpu.dot_dimension_numbers<[1], [0], [0], [1], [0, 0, 1, 1], [], []>} : vector<8x4xf32>, vector<4x768xf32>, vector<8x768xf32> -> vector<8x768xf32>
    %18 = arith.addf %14, %17 : vector<8x768xf32>
    %c748_i32 = arith.constant 748 : i32
    %19 = tpu.dynamic_rotate %0 by %c748_i32 dim 1 : vector<4x768xf32>, i32 -> vector<4x768xf32>
    %c40 = arith.constant 40 : index
    %c0_11 = arith.constant 0 : index
    %20 = vector.load %arg2[%c40, %c0_11] : memref<80x4xf32, #tpu.memory_space<vmem>>, vector<8x4xf32>
    %cst_12 = arith.constant dense<0.000000e+00> : vector<8x768xf32>
    %21 = tpu.matmul %20, %19, %cst_12 {dimension_numbers = #tpu.dot_dimension_numbers<[1], [0], [0], [1], [0, 0, 1, 1], [], []>} : vector<8x4xf32>, vector<4x768xf32>, vector<8x768xf32> -> vector<8x768xf32>
    %22 = arith.addf %18, %21 : vector<8x768xf32>
    %c732_i32 = arith.constant 732 : i32
    %23 = tpu.dynamic_rotate %0 by %c732_i32 dim 1 : vector<4x768xf32>, i32 -> vector<4x768xf32>
    %c48 = arith.constant 48 : index
    %c0_13 = arith.constant 0 : index
    %24 = vector.load %arg2[%c48, %c0_13] : memref<80x4xf32, #tpu.memory_space<vmem>>, vector<8x4xf32>
    %cst_14 = arith.constant dense<0.000000e+00> : vector<8x768xf32>
    %25 = tpu.matmul %24, %23, %cst_14 {dimension_numbers = #tpu.dot_dimension_numbers<[1], [0], [0], [1], [0, 0, 1, 1], [], []>} : vector<8x4xf32>, vector<4x768xf32>, vector<8x768xf32> -> vector<8x768xf32>
    %26 = arith.addf %22, %25 : vector<8x768xf32>
    %c731_i32 = arith.constant 731 : i32
    %27 = tpu.dynamic_rotate %0 by %c731_i32 dim 1 : vector<4x768xf32>, i32 -> vector<4x768xf32>
    %c56 = arith.constant 56 : index
    %c0_15 = arith.constant 0 : index
    %28 = vector.load %arg2[%c56, %c0_15] : memref<80x4xf32, #tpu.memory_space<vmem>>, vector<8x4xf32>
    %cst_16 = arith.constant dense<0.000000e+00> : vector<8x768xf32>
    %29 = tpu.matmul %28, %27, %cst_16 {dimension_numbers = #tpu.dot_dimension_numbers<[1], [0], [0], [1], [0, 0, 1, 1], [], []>} : vector<8x4xf32>, vector<4x768xf32>, vector<8x768xf32> -> vector<8x768xf32>
    %30 = arith.addf %26, %29 : vector<8x768xf32>
    %c730_i32 = arith.constant 730 : i32
    %31 = tpu.dynamic_rotate %0 by %c730_i32 dim 1 : vector<4x768xf32>, i32 -> vector<4x768xf32>
    %c64 = arith.constant 64 : index
    %c0_17 = arith.constant 0 : index
    %32 = vector.load %arg2[%c64, %c0_17] : memref<80x4xf32, #tpu.memory_space<vmem>>, vector<8x4xf32>
    %cst_18 = arith.constant dense<0.000000e+00> : vector<8x768xf32>
    %33 = tpu.matmul %32, %31, %cst_18 {dimension_numbers = #tpu.dot_dimension_numbers<[1], [0], [0], [1], [0, 0, 1, 1], [], []>} : vector<8x4xf32>, vector<4x768xf32>, vector<8x768xf32> -> vector<8x768xf32>
    %34 = arith.addf %30, %33 : vector<8x768xf32>
    %c72 = arith.constant 72 : index
    %c0_19 = arith.constant 0 : index
    %35 = vector.load %arg2[%c72, %c0_19] : memref<80x4xf32, #tpu.memory_space<vmem>>, vector<8x1xf32>
    %36 = vector.broadcast %35 : vector<8x1xf32> to vector<8x768xf32>
    %37 = arith.addf %34, %36 : vector<8x768xf32>
    %c0_20 = arith.constant 0 : index
    %c0_21 = arith.constant 0 : index
    %38 = vector.load %arg3[%c0_20, %c0_21] : memref<8x768xf32, #tpu.memory_space<vmem>>, vector<8x768xf32>
    tpu.vector_store %arg3[%c0_20, %c0_21], %37 {strides = array<i32>} : memref<8x768xf32, #tpu.memory_space<vmem>>, vector<8x768xf32>,
    return
  }
  func.func @transform_0(%arg0: i32) -> (i32, i32) {
    %c0_i32 = arith.constant 0 : i32
    %c0_i32_0 = arith.constant 0 : i32
    %c0_i32_1 = arith.constant 0 : i32
    return %c0_i32, %c0_i32_0 : i32, i32
  }
  func.func @transform_1(%arg0: i32) -> (i32, i32) {
    %c0_i32 = arith.constant 0 : i32
    %c0_i32_0 = arith.constant 0 : i32
    %c0_i32_1 = arith.constant 0 : i32
    return %c0_i32, %c0_i32_0 : i32, i32
  }
  func.func @transform_2(%arg0: i32) -> (i32, i32) {
    %c0_i32 = arith.constant 0 : i32
    %c0_i32_0 = arith.constant 0 : i32
    %c0_i32_1 = arith.constant 0 : i32
    return %c0_i32, %c0_i32_0 : i32, i32
  }
}

</mosaic_0001>

<llo_original>
// kernel: tpu_custom_call.1
$region0: #{tpu_custom_call.1}
  #allocation0 [shape = 'u32[]', space=smem, size = 0x4, offset = 0x4, fixed_abs, tag = 'smem constant byte address 0x4 - core index']
  #allocation1 [shape = 'u32[144,128]{1,0:T(1,128)}', space=vmem, size = 0x12000, scoped, tag = 'internal scratch']
  %s0 = inlined_call_operand.vmem [shape: f32[4,768], index: 0, kind: input, shape index: {}]
  %s1 = inlined_call_operand.vmem [shape: f32[80,4], index: 1, kind: input, shape index: {}]
  %s2 = inlined_call_operand.hbm [shape: f32[8,768], index: 2, kind: output, shape index: {}]
  %s3 = sld [smem:[#allocation0]]
  $region18: #{tpu_custom_call.1} parent=0
    _
  %s5 = ssub.s32 1, %s3
  %s6 = scalar_select 0, %s5, %s3
  $region1: #{tpu_custom_call.1} parent=0
    #allocation2 [shape = 'u8[24576]{0}', space=vmem, size = 0x6000, scoped, tag = 'output window, operand 0, single buffered']
    #allocation3 [shape = 's32[1]{0}', space=sflag, size = 0x4, scoped, tag = 'scoped memory for tpu_custom_call.1']
    %7 = vsyncpa [#allocation3], 0
    // Predicated region
    $region2: #{tpu_custom_call.1} parent=1 // pred_check
      _
    $region3: #{tpu_custom_call.1} parent=1 // pred_check_branch
      %9 = sbr.rel (0) target = $region5
    $region4: #{tpu_custom_call.1} parent=1 // pred_region
      _
    $region5: #{tpu_custom_call.1} parent=1 // pred_fallthru
      _
    // Predicated region
    $region6: #{tpu_custom_call.1} parent=1 // pred_check
      _
    $region7: #{tpu_custom_call.1} parent=1 // pred_check_branch
      %11 = sbr.rel (0) target = $region9
    $region8: #{tpu_custom_call.1} parent=1 // pred_region
      _
    $region9: #{tpu_custom_call.1} parent=1 // pred_fallthru
      _
    %v12 = vld [vmem:[%s0] sm:$0xff]
    %v13 = vld [vmem:[%s0 + $0x8] sm:$0xff]
    %v14 = vld [vmem:[%s0 + $0x10] sm:$0xff]
    %v15 = vld [vmem:[%s1] sm:$0xff]
    %v19 = vcombine.high %v12, %v12
    %v20 = vcombine.high %v13, %v13
    %v21 = vcombine.high %v14, %v14
    %25 = vrot.lane.b32.xlu0 %v12, 127
    %v26 = vpop.permute.xlu0 %25
    %27 = vrot.lane.b32.xlu0 %v19, 127
    %v28 = vpop.permute.xlu0 %27
    %29 = vrot.lane.b32.xlu0 %v13, 127
    %v30 = vpop.permute.xlu0 %29
    %31 = vrot.lane.b32.xlu0 %v20, 127
    %v32 = vpop.permute.xlu0 %31
    %33 = vrot.lane.b32.xlu0 %v14, 127
    %v34 = vpop.permute.xlu0 %33
    %35 = vrot.lane.b32.xlu0 %v21, 127
    %v36 = vpop.permute.xlu0 %35
    %v37 = vlaneseq
    %v38 = vand.u32 %v37, 127
    %vm39 = vcmp.lt.s32.totalorder %v38, 127
    %v40 = vsel %vm39, %v34, %v36
    %v41 = vsel %vm39, %v32, %v34
    %v42 = vsel %vm39, %v30, %v32
    %v43 = vsel %vm39, %v28, %v30
    %v44 = vsel %vm39, %v26, %v28
    %v45 = vsel %vm39, %v36, %v26
    %v46 = vld [vmem:[%s1 + $0x8] sm:$0xff]
    %vm47 = vcmask 31744
    %v49 = vsel %vm47, %v46, 0
    %vm51 = vcmask 1043456
    %v53 = vsel %vm51, %v44, 0
    %v56 = vsel %vm51, %v43, 0
    %v59 = vsel %vm51, %v42, 0
    %v62 = vsel %vm51, %v41, 0
    %v65 = vsel %vm51, %v40, 0
    %v68 = vsel %vm51, %v45, 0
    %70 = vmatprep.subr.mxu0 0.0
    %71 = vmatpush1.msra.mxu0 0.0
    %72 = vmatprep.subr.mxu0 0.0
    %73 = vmatpush1.msra.mxu0 0.0
    %74 = vmatprep.subr.mxu0 0.0
    %75 = vmatpush1.msra.mxu0 0.0
    %76 = vmatprep.subr.mxu0 0.0
    %77 = vmatpush1.msra.mxu0 0.0
    %78 = vmatprep.subr.mxu0 0.0
    %79 = vmatpush1.msra.mxu0 0.0
    %80 = vmatprep.subr.mxu0 0.0
    %81 = vmatpush1.msra.mxu0 0.0
    %82 = vmatprep.subr.mxu0 0.0
    %83 = vmatpush1.msra.mxu0 0.0
    %84 = vmatprep.subr.mxu0 0.0
    %85 = vmatpush1.msra.mxu0 0.0
    %86 = vmatprep.subr.mxu0 0.0
    %87 = vmatpush1.msra.mxu0 0.0
    %88 = vmatprep.subr.mxu0 0.0
    %89 = vmatpush1.msra.mxu0 0.0
    %90 = vmatprep.subr.mxu0 0.0
    %91 = vmatpush1.msra.mxu0 0.0
    %92 = vmatprep.subr.mxu0 0.0
    %93 = vmatpush1.msra.mxu0 0.0
    %94 = vmatprep.subr.mxu0 0.0
    %95 = vmatpush1.msra.mxu0 0.0
    %96 = vmatprep.subr.mxu0 0.0
    %97 = vmatpush1.msra.mxu0 0.0
    %98 = vmatprep.subr.mxu0 0.0
    %99 = vmatpush1.msra.mxu0 0.0
    %100 = vmatprep.subr.mxu0 %v56
    %101 = vmatpush1.msra.mxu0 %v53
    %102 = vmatprep.subr.mxu0 0.0
    %103 = vmatpush2.msra.mxu0 0.0
    %104 = vmatprep.subr.mxu0 0.0
    %105 = vmatpush2.msra.mxu0 0.0
    %106 = vmatprep.subr.mxu0 0.0
    %107 = vmatpush2.msra.mxu0 0.0
    %108 = vmatprep.subr.mxu0 0.0
    %109 = vmatpush2.msra.mxu0 0.0
    %110 = vmatprep.subr.mxu0 0.0
    %111 = vmatpush2.msra.mxu0 0.0
    %112 = vmatprep.subr.mxu0 0.0
    %113 = vmatpush2.msra.mxu0 0.0
    %114 = vmatprep.subr.mxu0 0.0
    %115 = vmatpush2.msra.mxu0 0.0
    %116 = vmatprep.subr.mxu0 0.0
    %117 = vmatpush2.msra.mxu0 0.0
    %118 = vmatprep.subr.mxu0 0.0
    %119 = vmatpush2.msra.mxu0 0.0
    %120 = vmatprep.subr.mxu0 0.0
    %121 = vmatpush2.msra.mxu0 0.0
    %122 = vmatprep.subr.mxu0 0.0
    %123 = vmatpush2.msra.mxu0 0.0
    %124 = vmatprep.subr.mxu0 0.0
    %125 = vmatpush2.msra.mxu0 0.0
    %126 = vmatprep.subr.mxu0 0.0
    %127 = vmatpush2.msra.mxu0 0.0
    %128 = vmatprep.subr.mxu0 0.0
    %129 = vmatpush2.msra.mxu0 0.0
    %130 = vmatprep.subr.mxu0 0.0
    %131 = vmatpush2.msra.mxu0 0.0
    %132 = vmatprep.subr.mxu0 0.0
    %133 = vmatpush2.msra.mxu0 0.0
    %134 = vmatprep.mubr.f32.mxu0 0.0
    %135 = vmatmul.mubr.f32.gmra.mxu0 %v49
    %v136 = vpop.f32.mrf.mxu0
    %v137 = vadd.f32 0.0, %v136
    %v138 = vpop.f32.mrf.mxu0
    %v139 = vadd.f32 0.0, %v138
    %140 = vdwg.mxu0
    %141 = vmatprep.subr.mxu0 0.0
    %142 = vmatpush1.msra.mxu0 0.0
    %143 = vmatprep.subr.mxu0 0.0
    %144 = vmatpush1.msra.mxu0 0.0
    %145 = vmatprep.subr.mxu0 0.0
    %146 = vmatpush1.msra.mxu0 0.0
    %147 = vmatprep.subr.mxu0 0.0
    %148 = vmatpush1.msra.mxu0 0.0
    %149 = vmatprep.subr.mxu0 0.0
    %150 = vmatpush1.msra.mxu0 0.0
    %151 = vmatprep.subr.mxu0 0.0
    %152 = vmatpush1.msra.mxu0 0.0
    %153 = vmatprep.subr.mxu0 0.0
    %154 = vmatpush1.msra.mxu0 0.0
    %155 = vmatprep.subr.mxu0 0.0
    %156 = vmatpush1.msra.mxu0 0.0
    %157 = vmatprep.subr.mxu0 0.0
    %158 = vmatpush1.msra.mxu0 0.0
    %159 = vmatprep.subr.mxu0 0.0
    %160 = vmatpush1.msra.mxu0 0.0
    %161 = vmatprep.subr.mxu0 0.0
    %162 = vmatpush1.msra.mxu0 0.0
    %163 = vmatprep.subr.mxu0 0.0
    %164 = vmatpush1.msra.mxu0 0.0
    %165 = vmatprep.subr.mxu0 0.0
    %166 = vmatpush1.msra.mxu0 0.0
    %167 = vmatprep.subr.mxu0 0.0
    %168 = vmatpush1.msra.mxu0 0.0
    %169 = vmatprep.subr.mxu0 0.0
    %170 = vmatpush1.msra.mxu0 0.0
    %171 = vmatprep.subr.mxu0 %v62
    %172 = vmatpush1.msra.mxu0 %v59
    %173 = vmatprep.subr.mxu0 0.0
    %174 = vmatpush2.msra.mxu0 0.0
    %175 = vmatprep.subr.mxu0 0.0
    %176 = vmatpush2.msra.mxu0 0.0
    %177 = vmatprep.subr.mxu0 0.0
    %178 = vmatpush2.msra.mxu0 0.0
    %179 = vmatprep.subr.mxu0 0.0
    %180 = vmatpush2.msra.mxu0 0.0
    %181 = vmatprep.subr.mxu0 0.0
    %182 = vmatpush2.msra.mxu0 0.0
    %183 = vmatprep.subr.mxu0 0.0
    %184 = vmatpush2.msra.mxu0 0.0
    %185 = vmatprep.subr.mxu0 0.0
    %186 = vmatpush2.msra.mxu0 0.0
    %187 = vmatprep.subr.mxu0 0.0
    %188 = vmatpush2.msra.mxu0 0.0
    %189 = vmatprep.subr.mxu0 0.0
    %190 = vmatpush2.msra.mxu0 0.0
    %191 = vmatprep.subr.mxu0 0.0
    %192 = vmatpush2.msra.mxu0 0.0
    %193 = vmatprep.subr.mxu0 0.0
    %194 = vmatpush2.msra.mxu0 0.0
    %195 = vmatprep.subr.mxu0 0.0
    %196 = vmatpush2.msra.mxu0 0.0
    %197 = vmatprep.subr.mxu0 0.0
    %198 = vmatpush2.msra.mxu0 0.0
    %199 = vmatprep.subr.mxu0 0.0
    %200 = vmatpush2.msra.mxu0 0.0
    %201 = vmatprep.subr.mxu0 0.0
    %202 = vmatpush2.msra.mxu0 0.0
    %203 = vmatprep.subr.mxu0 0.0
    %204 = vmatpush2.msra.mxu0 0.0
    %205 = vmatprep.mubr.f32.mxu0 0.0
    %206 = vmatmul.mubr.f32.gmra.mxu0 %v49
    %v207 = vpop.f32.mrf.mxu0
    %v208 = vadd.f32 0.0, %v207
    %v209 = vpop.f32.mrf.mxu0
    %v210 = vadd.f32 0.0, %v209
    %211 = vdwg.mxu0
    %212 = vmatprep.subr.mxu0 0.0
    %213 = vmatpush1.msra.mxu0 0.0
    %214 = vmatprep.subr.mxu0 0.0
    %215 = vmatpush1.msra.mxu0 0.0
    %216 = vmatprep.subr.mxu0 0.0
    %217 = vmatpush1.msra.mxu0 0.0
    %218 = vmatprep.subr.mxu0 0.0
    %219 = vmatpush1.msra.mxu0 0.0
    %220 = vmatprep.subr.mxu0 0.0
    %221 = vmatpush1.msra.mxu0 0.0
    %222 = vmatprep.subr.mxu0 0.0
    %223 = vmatpush1.msra.mxu0 0.0
    %224 = vmatprep.subr.mxu0 0.0
    %225 = vmatpush1.msra.mxu0 0.0
    %226 = vmatprep.subr.mxu0 0.0
    %227 = vmatpush1.msra.mxu0 0.0
    %228 = vmatprep.subr.mxu0 0.0
    %229 = vmatpush1.msra.mxu0 0.0
    %230 = vmatprep.subr.mxu0 0.0
    %231 = vmatpush1.msra.mxu0 0.0
    %232 = vmatprep.subr.mxu0 0.0
    %233 = vmatpush1.msra.mxu0 0.0
    %234 = vmatprep.subr.mxu0 0.0
    %235 = vmatpush1.msra.mxu0 0.0
    %236 = vmatprep.subr.mxu0 0.0
    %237 = vmatpush1.msra.mxu0 0.0
    %238 = vmatprep.subr.mxu0 0.0
    %239 = vmatpush1.msra.mxu0 0.0
    %240 = vmatprep.subr.mxu0 0.0
    %241 = vmatpush1.msra.mxu0 0.0
    %242 = vmatprep.subr.mxu0 %v68
    %243 = vmatpush1.msra.mxu0 %v65
    %244 = vmatprep.subr.mxu0 0.0
    %245 = vmatpush2.msra.mxu0 0.0
    %246 = vmatprep.subr.mxu0 0.0
    %247 = vmatpush2.msra.mxu0 0.0
    %248 = vmatprep.subr.mxu0 0.0
    %249 = vmatpush2.msra.mxu0 0.0
    %250 = vmatprep.subr.mxu0 0.0
    %251 = vmatpush2.msra.mxu0 0.0
    %252 = vmatprep.subr.mxu0 0.0
    %253 = vmatpush2.msra.mxu0 0.0
    %254 = vmatprep.subr.mxu0 0.0
    %255 = vmatpush2.msra.mxu0 0.0
    %256 = vmatprep.subr.mxu0 0.0
    %257 = vmatpush2.msra.mxu0 0.0
    %258 = vmatprep.subr.mxu0 0.0
    %259 = vmatpush2.msra.mxu0 0.0
    %260 = vmatprep.subr.mxu0 0.0
    %261 = vmatpush2.msra.mxu0 0.0
    %262 = vmatprep.subr.mxu0 0.0
    %263 = vmatpush2.msra.mxu0 0.0
    %264 = vmatprep.subr.mxu0 0.0
    %265 = vmatpush2.msra.mxu0 0.0
    %266 = vmatprep.subr.mxu0 0.0
    %267 = vmatpush2.msra.mxu0 0.0
    %268 = vmatprep.subr.mxu0 0.0
    %269 = vmatpush2.msra.mxu0 0.0
    %270 = vmatprep.subr.mxu0 0.0
    %271 = vmatpush2.msra.mxu0 0.0
    %272 = vmatprep.subr.mxu0 0.0
    %273 = vmatpush2.msra.mxu0 0.0
    %274 = vmatprep.subr.mxu0 0.0
    %275 = vmatpush2.msra.mxu0 0.0
    %276 = vmatprep.mubr.f32.mxu0 0.0
    %277 = vmatmul.mubr.f32.gmra.mxu0 %v49
    %v278 = vpop.f32.mrf.mxu0
    %v279 = vadd.f32 0.0, %v278
    %v280 = vpop.f32.mrf.mxu0
    %v281 = vadd.f32 0.0, %v280
    %282 = vdwg.mxu0
    %v284 = vsel %vm47, %v15, 0
    %v286 = vsel %vm51, %v12, 0
    %v288 = vsel %vm51, %v19, 0
    %v290 = vsel %vm51, %v13, 0
    %v292 = vsel %vm51, %v20, 0
    %v294 = vsel %vm51, %v14, 0
    %v296 = vsel %vm51, %v21, 0
    %298 = vmatprep.subr.mxu0 0.0
    %299 = vmatpush1.msra.mxu0 0.0
    %300 = vmatprep.subr.mxu0 0.0
    %301 = vmatpush1.msra.mxu0 0.0
    %302 = vmatprep.subr.mxu0 0.0
    %303 = vmatpush1.msra.mxu0 0.0
    %304 = vmatprep.subr.mxu0 0.0
    %305 = vmatpush1.msra.mxu0 0.0
    %306 = vmatprep.subr.mxu0 0.0
    %307 = vmatpush1.msra.mxu0 0.0
    %308 = vmatprep.subr.mxu0 0.0
    %309 = vmatpush1.msra.mxu0 0.0
    %310 = vmatprep.subr.mxu0 0.0
    %311 = vmatpush1.msra.mxu0 0.0
    %312 = vmatprep.subr.mxu0 0.0
    %313 = vmatpush1.msra.mxu0 0.0
    %314 = vmatprep.subr.mxu0 0.0
    %315 = vmatpush1.msra.mxu0 0.0
    %316 = vmatprep.subr.mxu0 0.0
    %317 = vmatpush1.msra.mxu0 0.0
    %318 = vmatprep.subr.mxu0 0.0
    %319 = vmatpush1.msra.mxu0 0.0
    %320 = vmatprep.subr.mxu0 0.0
    %321 = vmatpush1.msra.mxu0 0.0
    %322 = vmatprep.subr.mxu0 0.0
    %323 = vmatpush1.msra.mxu0 0.0
    %324 = vmatprep.subr.mxu0 0.0
    %325 = vmatpush1.msra.mxu0 0.0
    %326 = vmatprep.subr.mxu0 0.0
    %327 = vmatpush1.msra.mxu0 0.0
    %328 = vmatprep.subr.mxu0 %v288
    %329 = vmatpush1.msra.mxu0 %v286
    %330 = vmatprep.subr.mxu0 0.0
    %331 = vmatpush2.msra.mxu0 0.0
    %332 = vmatprep.subr.mxu0 0.0
    %333 = vmatpush2.msra.mxu0 0.0
    %334 = vmatprep.subr.mxu0 0.0
    %335 = vmatpush2.msra.mxu0 0.0
    %336 = vmatprep.subr.mxu0 0.0
    %337 = vmatpush2.msra.mxu0 0.0
    %338 = vmatprep.subr.mxu0 0.0
    %339 = vmatpush2.msra.mxu0 0.0
    %340 = vmatprep.subr.mxu0 0.0
    %341 = vmatpush2.msra.mxu0 0.0
    %342 = vmatprep.subr.mxu0 0.0
    %343 = vmatpush2.msra.mxu0 0.0
    %344 = vmatprep.subr.mxu0 0.0
    %345 = vmatpush2.msra.mxu0 0.0
    %346 = vmatprep.subr.mxu0 0.0
    %347 = vmatpush2.msra.mxu0 0.0
    %348 = vmatprep.subr.mxu0 0.0
    %349 = vmatpush2.msra.mxu0 0.0
    %350 = vmatprep.subr.mxu0 0.0
    %351 = vmatpush2.msra.mxu0 0.0
    %352 = vmatprep.subr.mxu0 0.0
    %353 = vmatpush2.msra.mxu0 0.0
    %354 = vmatprep.subr.mxu0 0.0
    %355 = vmatpush2.msra.mxu0 0.0
    %356 = vmatprep.subr.mxu0 0.0
    %357 = vmatpush2.msra.mxu0 0.0
    %358 = vmatprep.subr.mxu0 0.0
    %359 = vmatpush2.msra.mxu0 0.0
    %360 = vmatprep.subr.mxu0 0.0
    %361 = vmatpush2.msra.mxu0 0.0
    %362 = vmatprep.mubr.f32.mxu0 0.0
    %363 = vmatmul.mubr.f32.gmra.mxu0 %v284
    %v364 = vpop.f32.mrf.mxu0
    %v365 = vadd.f32 %v137, %v364
    %v366 = vpop.f32.mrf.mxu0
    %v367 = vadd.f32 %v139, %v366
    %368 = vdwg.mxu0
    %369 = vmatprep.subr.mxu0 0.0
    %370 = vmatpush1.msra.mxu0 0.0
    %371 = vmatprep.subr.mxu0 0.0
    %372 = vmatpush1.msra.mxu0 0.0
    %373 = vmatprep.subr.mxu0 0.0
    %374 = vmatpush1.msra.mxu0 0.0
    %375 = vmatprep.subr.mxu0 0.0
    %376 = vmatpush1.msra.mxu0 0.0
    %377 = vmatprep.subr.mxu0 0.0
    %378 = vmatpush1.msra.mxu0 0.0
    %379 = vmatprep.subr.mxu0 0.0
    %380 = vmatpush1.msra.mxu0 0.0
    %381 = vmatprep.subr.mxu0 0.0
    %382 = vmatpush1.msra.mxu0 0.0
    %383 = vmatprep.subr.mxu0 0.0
    %384 = vmatpush1.msra.mxu0 0.0
    %385 = vmatprep.subr.mxu0 0.0
    %386 = vmatpush1.msra.mxu0 0.0
    %387 = vmatprep.subr.mxu0 0.0
    %388 = vmatpush1.msra.mxu0 0.0
    %389 = vmatprep.subr.mxu0 0.0
    %390 = vmatpush1.msra.mxu0 0.0
    %391 = vmatprep.subr.mxu0 0.0
    %392 = vmatpush1.msra.mxu0 0.0
    %393 = vmatprep.subr.mxu0 0.0
    %394 = vmatpush1.msra.mxu0 0.0
    %395 = vmatprep.subr.mxu0 0.0
    %396 = vmatpush1.msra.mxu0 0.0
    %397 = vmatprep.subr.mxu0 0.0
    %398 = vmatpush1.msra.mxu0 0.0
    %399 = vmatprep.subr.mxu0 %v292
    %400 = vmatpush1.msra.mxu0 %v290
    %401 = vmatprep.subr.mxu0 0.0
    %402 = vmatpush2.msra.mxu0 0.0
    %403 = vmatprep.subr.mxu0 0.0
    %404 = vmatpush2.msra.mxu0 0.0
    %405 = vmatprep.subr.mxu0 0.0
    %406 = vmatpush2.msra.mxu0 0.0
    %407 = vmatprep.subr.mxu0 0.0
    %408 = vmatpush2.msra.mxu0 0.0
    %409 = vmatprep.subr.mxu0 0.0
    %410 = vmatpush2.msra.mxu0 0.0
    %411 = vmatprep.subr.mxu0 0.0
    %412 = vmatpush2.msra.mxu0 0.0
    %413 = vmatprep.subr.mxu0 0.0
    %414 = vmatpush2.msra.mxu0 0.0
    %415 = vmatprep.subr.mxu0 0.0
    %416 = vmatpush2.msra.mxu0 0.0
    %417 = vmatprep.subr.mxu0 0.0
    %418 = vmatpush2.msra.mxu0 0.0
    %419 = vmatprep.subr.mxu0 0.0
    %420 = vmatpush2.msra.mxu0 0.0
    %421 = vmatprep.subr.mxu0 0.0
    %422 = vmatpush2.msra.mxu0 0.0
    %423 = vmatprep.subr.mxu0 0.0
    %424 = vmatpush2.msra.mxu0 0.0
    %425 = vmatprep.subr.mxu0 0.0
    %426 = vmatpush2.msra.mxu0 0.0
    %427 = vmatprep.subr.mxu0 0.0
    %428 = vmatpush2.msra.mxu0 0.0
    %429 = vmatprep.subr.mxu0 0.0
    %430 = vmatpush2.msra.mxu0 0.0
    %431 = vmatprep.subr.mxu0 0.0
    %432 = vmatpush2.msra.mxu0 0.0
    %433 = vmatprep.mubr.f32.mxu0 0.0
    %434 = vmatmul.mubr.f32.gmra.mxu0 %v284
    %v435 = vpop.f32.mrf.mxu0
    %v436 = vadd.f32 %v208, %v435
    %v437 = vpop.f32.mrf.mxu0
    %v438 = vadd.f32 %v210, %v437
    %439 = vdwg.mxu0
    %440 = vmatprep.subr.mxu0 0.0
    %441 = vmatpush1.msra.mxu0 0.0
    %442 = vmatprep.subr.mxu0 0.0
    %443 = vmatpush1.msra.mxu0 0.0
    %444 = vmatprep.subr.mxu0 0.0
    %445 = vmatpush1.msra.mxu0 0.0
    %446 = vmatprep.subr.mxu0 0.0
    %447 = vmatpush1.msra.mxu0 0.0
    %448 = vmatprep.subr.mxu0 0.0
    %449 = vmatpush1.msra.mxu0 0.0
    %450 = vmatprep.subr.mxu0 0.0
    %451 = vmatpush1.msra.mxu0 0.0
    %452 = vmatprep.subr.mxu0 0.0
    %453 = vmatpush1.msra.mxu0 0.0
    %454 = vmatprep.subr.mxu0 0.0
    %455 = vmatpush1.msra.mxu0 0.0
    %456 = vmatprep.subr.mxu0 0.0
    %457 = vmatpush1.msra.mxu0 0.0
    %458 = vmatprep.subr.mxu0 0.0
    %459 = vmatpush1.msra.mxu0 0.0
    %460 = vmatprep.subr.mxu0 0.0
    %461 = vmatpush1.msra.mxu0 0.0
    %462 = vmatprep.subr.mxu0 0.0
    %463 = vmatpush1.msra.mxu0 0.0
    %464 = vmatprep.subr.mxu0 0.0
    %465 = vmatpush1.msra.mxu0 0.0
    %466 = vmatprep.subr.mxu0 0.0
    %467 = vmatpush1.msra.mxu0 0.0
    %468 = vmatprep.subr.mxu0 0.0
    %469 = vmatpush1.msra.mxu0 0.0
    %470 = vmatprep.subr.mxu0 %v296
    %471 = vmatpush1.msra.mxu0 %v294
    %472 = vmatprep.subr.mxu0 0.0
    %473 = vmatpush2.msra.mxu0 0.0
    %474 = vmatprep.subr.mxu0 0.0
    %475 = vmatpush2.msra.mxu0 0.0
    %476 = vmatprep.subr.mxu0 0.0
    %477 = vmatpush2.msra.mxu0 0.0
    %478 = vmatprep.subr.mxu0 0.0
    %479 = vmatpush2.msra.mxu0 0.0
    %480 = vmatprep.subr.mxu0 0.0
    %481 = vmatpush2.msra.mxu0 0.0
    %482 = vmatprep.subr.mxu0 0.0
    %483 = vmatpush2.msra.mxu0 0.0
    %484 = vmatprep.subr.mxu0 0.0
    %485 = vmatpush2.msra.mxu0 0.0
    %486 = vmatprep.subr.mxu0 0.0
    %487 = vmatpush2.msra.mxu0 0.0
    %488 = vmatprep.subr.mxu0 0.0
    %489 = vmatpush2.msra.mxu0 0.0
    %490 = vmatprep.subr.mxu0 0.0
    %491 = vmatpush2.msra.mxu0 0.0
    %492 = vmatprep.subr.mxu0 0.0
    %493 = vmatpush2.msra.mxu0 0.0
    %494 = vmatprep.subr.mxu0 0.0
    %495 = vmatpush2.msra.mxu0 0.0
    %496 = vmatprep.subr.mxu0 0.0
    %497 = vmatpush2.msra.mxu0 0.0
    %498 = vmatprep.subr.mxu0 0.0
    %499 = vmatpush2.msra.mxu0 0.0
    %500 = vmatprep.subr.mxu0 0.0
    %501 = vmatpush2.msra.mxu0 0.0
    %502 = vmatprep.subr.mxu0 0.0
    %503 = vmatpush2.msra.mxu0 0.0
    %504 = vmatprep.mubr.f32.mxu0 0.0
    %505 = vmatmul.mubr.f32.gmra.mxu0 %v284
    %v506 = vpop.f32.mrf.mxu0
    %v507 = vadd.f32 %v279, %v506
    %v508 = vpop.f32.mrf.mxu0
    %v509 = vadd.f32 %v281, %v508
    %510 = vdwg.mxu0
    %511 = vrot.lane.b32.xlu0 %v12, 126
    %v512 = vpop.permute.xlu0 %511
    %513 = vrot.lane.b32.xlu0 %v19, 126
    %v514 = vpop.permute.xlu0 %513
    %515 = vrot.lane.b32.xlu0 %v13, 126
    %v516 = vpop.permute.xlu0 %515
    %517 = vrot.lane.b32.xlu0 %v20, 126
    %v518 = vpop.permute.xlu0 %517
    %519 = vrot.lane.b32.xlu0 %v14, 126
    %v520 = vpop.permute.xlu0 %519
    %521 = vrot.lane.b32.xlu0 %v21, 126
    %v522 = vpop.permute.xlu0 %521
    %vm523 = vcmp.lt.s32.totalorder %v38, 126
    %v524 = vsel %vm523, %v520, %v522
    %v525 = vsel %vm523, %v518, %v520
    %v526 = vsel %vm523, %v516, %v518
    %v527 = vsel %vm523, %v514, %v516
    %v528 = vsel %vm523, %v512, %v514
    %v529 = vsel %vm523, %v522, %v512
    %v530 = vld [vmem:[%s1 + $0x10] sm:$0xff]
    %v532 = vsel %vm47, %v530, 0
    %v535 = vsel %vm51, %v528, 0
    %v538 = vsel %vm51, %v527, 0
    %v541 = vsel %vm51, %v526, 0
    %v544 = vsel %vm51, %v525, 0
    %v547 = vsel %vm51, %v524, 0
    %v550 = vsel %vm51, %v529, 0
    %552 = vmatprep.subr.mxu0 0.0
    %553 = vmatpush1.msra.mxu0 0.0
    %554 = vmatprep.subr.mxu0 0.0
    %555 = vmatpush1.msra.mxu0 0.0
    %556 = vmatprep.subr.mxu0 0.0
    %557 = vmatpush1.msra.mxu0 0.0
    %558 = vmatprep.subr.mxu0 0.0
    %559 = vmatpush1.msra.mxu0 0.0
    %560 = vmatprep.subr.mxu0 0.0
    %561 = vmatpush1.msra.mxu0 0.0
    %562 = vmatprep.subr.mxu0 0.0
    %563 = vmatpush1.msra.mxu0 0.0
    %564 = vmatprep.subr.mxu0 0.0
    %565 = vmatpush1.msra.mxu0 0.0
    %566 = vmatprep.subr.mxu0 0.0
    %567 = vmatpush1.msra.mxu0 0.0
    %568 = vmatprep.subr.mxu0 0.0
    %569 = vmatpush1.msra.mxu0 0.0
    %570 = vmatprep.subr.mxu0 0.0
    %571 = vmatpush1.msra.mxu0 0.0
    %572 = vmatprep.subr.mxu0 0.0
    %573 = vmatpush1.msra.mxu0 0.0
    %574 = vmatprep.subr.mxu0 0.0
    %575 = vmatpush1.msra.mxu0 0.0
    %576 = vmatprep.subr.mxu0 0.0
    %577 = vmatpush1.msra.mxu0 0.0
    %578 = vmatprep.subr.mxu0 0.0
    %579 = vmatpush1.msra.mxu0 0.0
    %580 = vmatprep.subr.mxu0 0.0
    %581 = vmatpush1.msra.mxu0 0.0
    %582 = vmatprep.subr.mxu0 %v538
    %583 = vmatpush1.msra.mxu0 %v535
    %584 = vmatprep.subr.mxu0 0.0
    %585 = vmatpush2.msra.mxu0 0.0
    %586 = vmatprep.subr.mxu0 0.0
    %587 = vmatpush2.msra.mxu0 0.0
    %588 = vmatprep.subr.mxu0 0.0
    %589 = vmatpush2.msra.mxu0 0.0
    %590 = vmatprep.subr.mxu0 0.0
    %591 = vmatpush2.msra.mxu0 0.0
    %592 = vmatprep.subr.mxu0 0.0
    %593 = vmatpush2.msra.mxu0 0.0
    %594 = vmatprep.subr.mxu0 0.0
    %595 = vmatpush2.msra.mxu0 0.0
    %596 = vmatprep.subr.mxu0 0.0
    %597 = vmatpush2.msra.mxu0 0.0
    %598 = vmatprep.subr.mxu0 0.0
    %599 = vmatpush2.msra.mxu0 0.0
    %600 = vmatprep.subr.mxu0 0.0
    %601 = vmatpush2.msra.mxu0 0.0
    %602 = vmatprep.subr.mxu0 0.0
    %603 = vmatpush2.msra.mxu0 0.0
    %604 = vmatprep.subr.mxu0 0.0
    %605 = vmatpush2.msra.mxu0 0.0
    %606 = vmatprep.subr.mxu0 0.0
    %607 = vmatpush2.msra.mxu0 0.0
    %608 = vmatprep.subr.mxu0 0.0
    %609 = vmatpush2.msra.mxu0 0.0
    %610 = vmatprep.subr.mxu0 0.0
    %611 = vmatpush2.msra.mxu0 0.0
    %612 = vmatprep.subr.mxu0 0.0
    %613 = vmatpush2.msra.mxu0 0.0
    %614 = vmatprep.subr.mxu0 0.0
    %615 = vmatpush2.msra.mxu0 0.0
    %616 = vmatprep.mubr.f32.mxu0 0.0
    %617 = vmatmul.mubr.f32.gmra.mxu0 %v532
    %v618 = vpop.f32.mrf.mxu0
    %v619 = vadd.f32 0.0, %v618
    %v620 = vpop.f32.mrf.mxu0
    %v621 = vadd.f32 0.0, %v620
    %622 = vdwg.mxu0
    %623 = vmatprep.subr.mxu0 0.0
    %624 = vmatpush1.msra.mxu0 0.0
    %625 = vmatprep.subr.mxu0 0.0
    %626 = vmatpush1.msra.mxu0 0.0
    %627 = vmatprep.subr.mxu0 0.0
    %628 = vmatpush1.msra.mxu0 0.0
    %629 = vmatprep.subr.mxu0 0.0
    %630 = vmatpush1.msra.mxu0 0.0
    %631 = vmatprep.subr.mxu0 0.0
    %632 = vmatpush1.msra.mxu0 0.0
    %633 = vmatprep.subr.mxu0 0.0
    %634 = vmatpush1.msra.mxu0 0.0
    %635 = vmatprep.subr.mxu0 0.0
    %636 = vmatpush1.msra.mxu0 0.0
    %637 = vmatprep.subr.mxu0 0.0
    %638 = vmatpush1.msra.mxu0 0.0
    %639 = vmatprep.subr.mxu0 0.0
    %640 = vmatpush1.msra.mxu0 0.0
    %641 = vmatprep.subr.mxu0 0.0
    %642 = vmatpush1.msra.mxu0 0.0
    %643 = vmatprep.subr.mxu0 0.0
    %644 = vmatpush1.msra.mxu0 0.0
    %645 = vmatprep.subr.mxu0 0.0
    %646 = vmatpush1.msra.mxu0 0.0
    %647 = vmatprep.subr.mxu0 0.0
    %648 = vmatpush1.msra.mxu0 0.0
    %649 = vmatprep.subr.mxu0 0.0
    %650 = vmatpush1.msra.mxu0 0.0
    %651 = vmatprep.subr.mxu0 0.0
    %652 = vmatpush1.msra.mxu0 0.0
    %653 = vmatprep.subr.mxu0 %v544
    %654 = vmatpush1.msra.mxu0 %v541
    %655 = vmatprep.subr.mxu0 0.0
    %656 = vmatpush2.msra.mxu0 0.0
    %657 = vmatprep.subr.mxu0 0.0
    %658 = vmatpush2.msra.mxu0 0.0
    %659 = vmatprep.subr.mxu0 0.0
    %660 = vmatpush2.msra.mxu0 0.0
    %661 = vmatprep.subr.mxu0 0.0
    %662 = vmatpush2.msra.mxu0 0.0
    %663 = vmatprep.subr.mxu0 0.0
    %664 = vmatpush2.msra.mxu0 0.0
    %665 = vmatprep.subr.mxu0 0.0
    %666 = vmatpush2.msra.mxu0 0.0
    %667 = vmatprep.subr.mxu0 0.0
    %668 = vmatpush2.msra.mxu0 0.0
    %669 = vmatprep.subr.mxu0 0.0
    %670 = vmatpush2.msra.mxu0 0.0
    %671 = vmatprep.subr.mxu0 0.0
    %672 = vmatpush2.msra.mxu0 0.0
    %673 = vmatprep.subr.mxu0 0.0
    %674 = vmatpush2.msra.mxu0 0.0
    %675 = vmatprep.subr.mxu0 0.0
    %676 = vmatpush2.msra.mxu0 0.0
    %677 = vmatprep.subr.mxu0 0.0
    %678 = vmatpush2.msra.mxu0 0.0
    %679 = vmatprep.subr.mxu0 0.0
    %680 = vmatpush2.msra.mxu0 0.0
    %681 = vmatprep.subr.mxu0 0.0
    %682 = vmatpush2.msra.mxu0 0.0
    %683 = vmatprep.subr.mxu0 0.0
    %684 = vmatpush2.msra.mxu0 0.0
    %685 = vmatprep.subr.mxu0 0.0
    %686 = vmatpush2.msra.mxu0 0.0
    %687 = vmatprep.mubr.f32.mxu0 0.0
    %688 = vmatmul.mubr.f32.gmra.mxu0 %v532
    %v689 = vpop.f32.mrf.mxu0
    %v690 = vadd.f32 0.0, %v689
    %v691 = vpop.f32.mrf.mxu0
    %v692 = vadd.f32 0.0, %v691
    %693 = vdwg.mxu0
    %694 = vmatprep.subr.mxu0 0.0
    %695 = vmatpush1.msra.mxu0 0.0
    %696 = vmatprep.subr.mxu0 0.0
    %697 = vmatpush1.msra.mxu0 0.0
    %698 = vmatprep.subr.mxu0 0.0
    %699 = vmatpush1.msra.mxu0 0.0
    %700 = vmatprep.subr.mxu0 0.0
    %701 = vmatpush1.msra.mxu0 0.0
    %702 = vmatprep.subr.mxu0 0.0
    %703 = vmatpush1.msra.mxu0 0.0
    %704 = vmatprep.subr.mxu0 0.0
    %705 = vmatpush1.msra.mxu0 0.0
    %706 = vmatprep.subr.mxu0 0.0
    %707 = vmatpush1.msra.mxu0 0.0
    %708 = vmatprep.subr.mxu0 0.0
    %709 = vmatpush1.msra.mxu0 0.0
    %710 = vmatprep.subr.mxu0 0.0
    %711 = vmatpush1.msra.mxu0 0.0
    %712 = vmatprep.subr.mxu0 0.0
    %713 = vmatpush1.msra.mxu0 0.0
    %714 = vmatprep.subr.mxu0 0.0
    %715 = vmatpush1.msra.mxu0 0.0
    %716 = vmatprep.subr.mxu0 0.0
    %717 = vmatpush1.msra.mxu0 0.0
    %718 = vmatprep.subr.mxu0 0.0
    %719 = vmatpush1.msra.mxu0 0.0
    %720 = vmatprep.subr.mxu0 0.0
    %721 = vmatpush1.msra.mxu0 0.0
    %722 = vmatprep.subr.mxu0 0.0
    %723 = vmatpush1.msra.mxu0 0.0
    %724 = vmatprep.subr.mxu0 %v550
    %725 = vmatpush1.msra.mxu0 %v547
    %726 = vmatprep.subr.mxu0 0.0
    %727 = vmatpush2.msra.mxu0 0.0
    %728 = vmatprep.subr.mxu0 0.0
    %729 = vmatpush2.msra.mxu0 0.0
    %730 = vmatprep.subr.mxu0 0.0
    %731 = vmatpush2.msra.mxu0 0.0
    %732 = vmatprep.subr.mxu0 0.0
    %733 = vmatpush2.msra.mxu0 0.0
    %734 = vmatprep.subr.mxu0 0.0
    %735 = vmatpush2.msra.mxu0 0.0
    %736 = vmatprep.subr.mxu0 0.0
    %737 = vmatpush2.msra.mxu0 0.0
    %738 = vmatprep.subr.mxu0 0.0
    %739 = vmatpush2.msra.mxu0 0.0
    %740 = vmatprep.subr.mxu0 0.0
    %741 = vmatpush2.msra.mxu0 0.0
    %742 = vmatprep.subr.mxu0 0.0
    %743 = vmatpush2.msra.mxu0 0.0
    %744 = vmatprep.subr.mxu0 0.0
    %745 = vmatpush2.msra.mxu0 0.0
    %746 = vmatprep.subr.mxu0 0.0
    %747 = vmatpush2.msra.mxu0 0.0
    %748 = vmatprep.subr.mxu0 0.0
    %749 = vmatpush2.msra.mxu0 0.0
    %750 = vmatprep.subr.mxu0 0.0
    %751 = vmatpush2.msra.mxu0 0.0
    %752 = vmatprep.subr.mxu0 0.0
    %753 = vmatpush2.msra.mxu0 0.0
    %754 = vmatprep.subr.mxu0 0.0
    %755 = vmatpush2.msra.mxu0 0.0
    %756 = vmatprep.subr.mxu0 0.0
    %757 = vmatpush2.msra.mxu0 0.0
    %758 = vmatprep.mubr.f32.mxu0 0.0
    %759 = vmatmul.mubr.f32.gmra.mxu0 %v532
    %v760 = vpop.f32.mrf.mxu0
    %v761 = vadd.f32 0.0, %v760
    %v762 = vpop.f32.mrf.mxu0
    %v763 = vadd.f32 0.0, %v762
    %764 = vdwg.mxu0
    %v765 = vadd.f32 %v365, %v619
    %v766 = vadd.f32 %v367, %v621
    %v767 = vadd.f32 %v436, %v690
    %v768 = vadd.f32 %v438, %v692
    %v769 = vadd.f32 %v507, %v761
    %v770 = vadd.f32 %v509, %v763
    %771 = vrot.lane.b32.xlu0 %v12, 110
    %v772 = vpop.permute.xlu0 %771
    %773 = vrot.lane.b32.xlu0 %v19, 110
    %v774 = vpop.permute.xlu0 %773
    %775 = vrot.lane.b32.xlu0 %v13, 110
    %v776 = vpop.permute.xlu0 %775
    %777 = vrot.lane.b32.xlu0 %v20, 110
    %v778 = vpop.permute.xlu0 %777
    %779 = vrot.lane.b32.xlu0 %v14, 110
    %v780 = vpop.permute.xlu0 %779
    %781 = vrot.lane.b32.xlu0 %v21, 110
    %v782 = vpop.permute.xlu0 %781
    %vm783 = vcmp.lt.s32.totalorder %v38, 110
    %v784 = vsel %vm783, %v780, %v782
    %v785 = vsel %vm783, %v778, %v780
    %v786 = vsel %vm783, %v776, %v778
    %v787 = vsel %vm783, %v774, %v776
    %v788 = vsel %vm783, %v772, %v774
    %v789 = vsel %vm783, %v782, %v772
    %v790 = vld [vmem:[%s1 + $0x18] sm:$0xff]
    %v792 = vsel %vm47, %v790, 0
    %v795 = vsel %vm51, %v788, 0
    %v798 = vsel %vm51, %v787, 0
    %v801 = vsel %vm51, %v786, 0
    %v804 = vsel %vm51, %v785, 0
    %v807 = vsel %vm51, %v784, 0
    %v810 = vsel %vm51, %v789, 0
    %812 = vmatprep.subr.mxu0 0.0
    %813 = vmatpush1.msra.mxu0 0.0
    %814 = vmatprep.subr.mxu0 0.0
    %815 = vmatpush1.msra.mxu0 0.0
    %816 = vmatprep.subr.mxu0 0.0
    %817 = vmatpush1.msra.mxu0 0.0
    %818 = vmatprep.subr.mxu0 0.0
    %819 = vmatpush1.msra.mxu0 0.0
    %820 = vmatprep.subr.mxu0 0.0
    %821 = vmatpush1.msra.mxu0 0.0
    %822 = vmatprep.subr.mxu0 0.0
    %823 = vmatpush1.msra.mxu0 0.0
    %824 = vmatprep.subr.mxu0 0.0
    %825 = vmatpush1.msra.mxu0 0.0
    %826 = vmatprep.subr.mxu0 0.0
    %827 = vmatpush1.msra.mxu0 0.0
    %828 = vmatprep.subr.mxu0 0.0
    %829 = vmatpush1.msra.mxu0 0.0
    %830 = vmatprep.subr.mxu0 0.0
    %831 = vmatpush1.msra.mxu0 0.0
    %832 = vmatprep.subr.mxu0 0.0
    %833 = vmatpush1.msra.mxu0 0.0
    %834 = vmatprep.subr.mxu0 0.0
    %835 = vmatpush1.msra.mxu0 0.0
    %836 = vmatprep.subr.mxu0 0.0
    %837 = vmatpush1.msra.mxu0 0.0
    %838 = vmatprep.subr.mxu0 0.0
    %839 = vmatpush1.msra.mxu0 0.0
    %840 = vmatprep.subr.mxu0 0.0
    %841 = vmatpush1.msra.mxu0 0.0
    %842 = vmatprep.subr.mxu0 %v798
    %843 = vmatpush1.msra.mxu0 %v795
    %844 = vmatprep.subr.mxu0 0.0
    %845 = vmatpush2.msra.mxu0 0.0
    %846 = vmatprep.subr.mxu0 0.0
    %847 = vmatpush2.msra.mxu0 0.0
    %848 = vmatprep.subr.mxu0 0.0
    %849 = vmatpush2.msra.mxu0 0.0
    %850 = vmatprep.subr.mxu0 0.0
    %851 = vmatpush2.msra.mxu0 0.0
    %852 = vmatprep.subr.mxu0 0.0
    %853 = vmatpush2.msra.mxu0 0.0
    %854 = vmatprep.subr.mxu0 0.0
    %855 = vmatpush2.msra.mxu0 0.0
    %856 = vmatprep.subr.mxu0 0.0
    %857 = vmatpush2.msra.mxu0 0.0
    %858 = vmatprep.subr.mxu0 0.0
    %859 = vmatpush2.msra.mxu0 0.0
    %860 = vmatprep.subr.mxu0 0.0
    %861 = vmatpush2.msra.mxu0 0.0
    %862 = vmatprep.subr.mxu0 0.0
    %863 = vmatpush2.msra.mxu0 0.0
    %864 = vmatprep.subr.mxu0 0.0
    %865 = vmatpush2.msra.mxu0 0.0
    %866 = vmatprep.subr.mxu0 0.0
    %867 = vmatpush2.msra.mxu0 0.0
    %868 = vmatprep.subr.mxu0 0.0
    %869 = vmatpush2.msra.mxu0 0.0
    %870 = vmatprep.subr.mxu0 0.0
    %871 = vmatpush2.msra.mxu0 0.0
    %872 = vmatprep.subr.mxu0 0.0
    %873 = vmatpush2.msra.mxu0 0.0
    %874 = vmatprep.subr.mxu0 0.0
    %875 = vmatpush2.msra.mxu0 0.0
    %876 = vmatprep.mubr.f32.mxu0 0.0
    %877 = vmatmul.mubr.f32.gmra.mxu0 %v792
    %v878 = vpop.f32.mrf.mxu0
    %v879 = vadd.f32 0.0, %v878
    %v880 = vpop.f32.mrf.mxu0
    %v881 = vadd.f32 0.0, %v880
    %882 = vdwg.mxu0
    %883 = vmatprep.subr.mxu0 0.0
    %884 = vmatpush1.msra.mxu0 0.0
    %885 = vmatprep.subr.mxu0 0.0
    %886 = vmatpush1.msra.mxu0 0.0
    %887 = vmatprep.subr.mxu0 0.0
    %888 = vmatpush1.msra.mxu0 0.0
    %889 = vmatprep.subr.mxu0 0.0
    %890 = vmatpush1.msra.mxu0 0.0
    %891 = vmatprep.subr.mxu0 0.0
    %892 = vmatpush1.msra.mxu0 0.0
    %893 = vmatprep.subr.mxu0 0.0
    %894 = vmatpush1.msra.mxu0 0.0
    %895 = vmatprep.subr.mxu0 0.0
    %896 = vmatpush1.msra.mxu0 0.0
    %897 = vmatprep.subr.mxu0 0.0
    %898 = vmatpush1.msra.mxu0 0.0
    %899 = vmatprep.subr.mxu0 0.0
    %900 = vmatpush1.msra.mxu0 0.0
    %901 = vmatprep.subr.mxu0 0.0
    %902 = vmatpush1.msra.mxu0 0.0
    %903 = vmatprep.subr.mxu0 0.0
    %904 = vmatpush1.msra.mxu0 0.0
    %905 = vmatprep.subr.mxu0 0.0
    %906 = vmatpush1.msra.mxu0 0.0
    %907 = vmatprep.subr.mxu0 0.0
    %908 = vmatpush1.msra.mxu0 0.0
    %909 = vmatprep.subr.mxu0 0.0
    %910 = vmatpush1.msra.mxu0 0.0
    %911 = vmatprep.subr.mxu0 0.0
    %912 = vmatpush1.msra.mxu0 0.0
    %913 = vmatprep.subr.mxu0 %v804
    %914 = vmatpush1.msra.mxu0 %v801
    %915 = vmatprep.subr.mxu0 0.0
    %916 = vmatpush2.msra.mxu0 0.0
    %917 = vmatprep.subr.mxu0 0.0
    %918 = vmatpush2.msra.mxu0 0.0
    %919 = vmatprep.subr.mxu0 0.0
    %920 = vmatpush2.msra.mxu0 0.0
    %921 = vmatprep.subr.mxu0 0.0
    %922 = vmatpush2.msra.mxu0 0.0
    %923 = vmatprep.subr.mxu0 0.0
    %924 = vmatpush2.msra.mxu0 0.0
    %925 = vmatprep.subr.mxu0 0.0
    %926 = vmatpush2.msra.mxu0 0.0
    %927 = vmatprep.subr.mxu0 0.0
    %928 = vmatpush2.msra.mxu0 0.0
    %929 = vmatprep.subr.mxu0 0.0
    %930 = vmatpush2.msra.mxu0 0.0
    %931 = vmatprep.subr.mxu0 0.0
    %932 = vmatpush2.msra.mxu0 0.0
    %933 = vmatprep.subr.mxu0 0.0
    %934 = vmatpush2.msra.mxu0 0.0
    %935 = vmatprep.subr.mxu0 0.0
    %936 = vmatpush2.msra.mxu0 0.0
    %937 = vmatprep.subr.mxu0 0.0
    %938 = vmatpush2.msra.mxu0 0.0
    %939 = vmatprep.subr.mxu0 0.0
    %940 = vmatpush2.msra.mxu0 0.0
    %941 = vmatprep.subr.mxu0 0.0
    %942 = vmatpush2.msra.mxu0 0.0
    %943 = vmatprep.subr.mxu0 0.0
    %944 = vmatpush2.msra.mxu0 0.0
    %945 = vmatprep.subr.mxu0 0.0
    %946 = vmatpush2.msra.mxu0 0.0
    %947 = vmatprep.mubr.f32.mxu0 0.0
    %948 = vmatmul.mubr.f32.gmra.mxu0 %v792
    %v949 = vpop.f32.mrf.mxu0
    %v950 = vadd.f32 0.0, %v949
    %v951 = vpop.f32.mrf.mxu0
    %v952 = vadd.f32 0.0, %v951
    %953 = vdwg.mxu0
    %954 = vmatprep.subr.mxu0 0.0
    %955 = vmatpush1.msra.mxu0 0.0
    %956 = vmatprep.subr.mxu0 0.0
    %957 = vmatpush1.msra.mxu0 0.0
    %958 = vmatprep.subr.mxu0 0.0
    %959 = vmatpush1.msra.mxu0 0.0
    %960 = vmatprep.subr.mxu0 0.0
    %961 = vmatpush1.msra.mxu0 0.0
    %962 = vmatprep.subr.mxu0 0.0
    %963 = vmatpush1.msra.mxu0 0.0
    %964 = vmatprep.subr.mxu0 0.0
    %965 = vmatpush1.msra.mxu0 0.0
    %966 = vmatprep.subr.mxu0 0.0
    %967 = vmatpush1.msra.mxu0 0.0
    %968 = vmatprep.subr.mxu0 0.0
    %969 = vmatpush1.msra.mxu0 0.0
    %970 = vmatprep.subr.mxu0 0.0
    %971 = vmatpush1.msra.mxu0 0.0
    %972 = vmatprep.subr.mxu0 0.0
    %973 = vmatpush1.msra.mxu0 0.0
    %974 = vmatprep.subr.mxu0 0.0
    %975 = vmatpush1.msra.mxu0 0.0
    %976 = vmatprep.subr.mxu0 0.0
    %977 = vmatpush1.msra.mxu0 0.0
    %978 = vmatprep.subr.mxu0 0.0
    %979 = vmatpush1.msra.mxu0 0.0
    %980 = vmatprep.subr.mxu0 0.0
    %981 = vmatpush1.msra.mxu0 0.0
    %982 = vmatprep.subr.mxu0 0.0
    %983 = vmatpush1.msra.mxu0 0.0
    %984 = vmatprep.subr.mxu0 %v810
    %985 = vmatpush1.msra.mxu0 %v807
    %986 = vmatprep.subr.mxu0 0.0
    %987 = vmatpush2.msra.mxu0 0.0
    %988 = vmatprep.subr.mxu0 0.0
    %989 = vmatpush2.msra.mxu0 0.0
    %990 = vmatprep.subr.mxu0 0.0
    %991 = vmatpush2.msra.mxu0 0.0
    %992 = vmatprep.subr.mxu0 0.0
    %993 = vmatpush2.msra.mxu0 0.0
    %994 = vmatprep.subr.mxu0 0.0
    %995 = vmatpush2.msra.mxu0 0.0
    %996 = vmatprep.subr.mxu0 0.0
    %997 = vmatpush2.msra.mxu0 0.0
    %998 = vmatprep.subr.mxu0 0.0
    %999 = vmatpush2.msra.mxu0 0.0
    %1000 = vmatprep.subr.mxu0 0.0
    %1001 = vmatpush2.msra.mxu0 0.0
    %1002 = vmatprep.subr.mxu0 0.0
    %1003 = vmatpush2.msra.mxu0 0.0
    %1004 = vmatprep.subr.mxu0 0.0
    %1005 = vmatpush2.msra.mxu0 0.0
    %1006 = vmatprep.subr.mxu0 0.0
    %1007 = vmatpush2.msra.mxu0 0.0
    %1008 = vmatprep.subr.mxu0 0.0
    %1009 = vmatpush2.msra.mxu0 0.0
    %1010 = vmatprep.subr.mxu0 0.0
    %1011 = vmatpush2.msra.mxu0 0.0
    %1012 = vmatprep.subr.mxu0 0.0
    %1013 = vmatpush2.msra.mxu0 0.0
    %1014 = vmatprep.subr.mxu0 0.0
    %1015 = vmatpush2.msra.mxu0 0.0
    %1016 = vmatprep.subr.mxu0 0.0
    %1017 = vmatpush2.msra.mxu0 0.0
    %1018 = vmatprep.mubr.f32.mxu0 0.0
    %1019 = vmatmul.mubr.f32.gmra.mxu0 %v792
    %v1020 = vpop.f32.mrf.mxu0
    %v1021 = vadd.f32 0.0, %v1020
    %v1022 = vpop.f32.mrf.mxu0
    %v1023 = vadd.f32 0.0, %v1022
    %1024 = vdwg.mxu0
    %v1025 = vadd.f32 %v765, %v879
    %v1026 = vadd.f32 %v766, %v881
    %v1027 = vadd.f32 %v767, %v950
    %v1028 = vadd.f32 %v768, %v952
    %v1029 = vadd.f32 %v769, %v1021
    %v1030 = vadd.f32 %v770, %v1023
    %1031 = vrot.lane.b32.xlu0 %v12, 109
    %v1032 = vpop.permute.xlu0 %1031
    %1033 = vrot.lane.b32.xlu0 %v19, 109
    %v1034 = vpop.permute.xlu0 %1033
    %1035 = vrot.lane.b32.xlu0 %v13, 109
    %v1036 = vpop.permute.xlu0 %1035
    %1037 = vrot.lane.b32.xlu0 %v20, 109
    %v1038 = vpop.permute.xlu0 %1037
    %1039 = vrot.lane.b32.xlu0 %v14, 109
    %v1040 = vpop.permute.xlu0 %1039
    %1041 = vrot.lane.b32.xlu0 %v21, 109
    %v1042 = vpop.permute.xlu0 %1041
    %vm1043 = vcmp.lt.s32.totalorder %v38, 109
    %v1044 = vsel %vm1043, %v1040, %v1042
    %v1045 = vsel %vm1043, %v1038, %v1040
    %v1046 = vsel %vm1043, %v1036, %v1038
    %v1047 = vsel %vm1043, %v1034, %v1036
    %v1048 = vsel %vm1043, %v1032, %v1034
    %v1049 = vsel %vm1043, %v1042, %v1032
    %v1050 = vld [vmem:[%s1 + $0x20] sm:$0xff]
    %v1052 = vsel %vm47, %v1050, 0
    %v1055 = vsel %vm51, %v1048, 0
    %v1058 = vsel %vm51, %v1047, 0
    %v1061 = vsel %vm51, %v1046, 0
    %v1064 = vsel %vm51, %v1045, 0
    %v1067 = vsel %vm51, %v1044, 0
    %v1070 = vsel %vm51, %v1049, 0
    %1072 = vmatprep.subr.mxu0 0.0
    %1073 = vmatpush1.msra.mxu0 0.0
    %1074 = vmatprep.subr.mxu0 0.0
    %1075 = vmatpush1.msra.mxu0 0.0
    %1076 = vmatprep.subr.mxu0 0.0
    %1077 = vmatpush1.msra.mxu0 0.0
    %1078 = vmatprep.subr.mxu0 0.0
    %1079 = vmatpush1.msra.mxu0 0.0
    %1080 = vmatprep.subr.mxu0 0.0
    %1081 = vmatpush1.msra.mxu0 0.0
    %1082 = vmatprep.subr.mxu0 0.0
    %1083 = vmatpush1.msra.mxu0 0.0
    %1084 = vmatprep.subr.mxu0 0.0
    %1085 = vmatpush1.msra.mxu0 0.0
    %1086 = vmatprep.subr.mxu0 0.0
    %1087 = vmatpush1.msra.mxu0 0.0
    %1088 = vmatprep.subr.mxu0 0.0
    %1089 = vmatpush1.msra.mxu0 0.0
    %1090 = vmatprep.subr.mxu0 0.0
    %1091 = vmatpush1.msra.mxu0 0.0
    %1092 = vmatprep.subr.mxu0 0.0
    %1093 = vmatpush1.msra.mxu0 0.0
    %1094 = vmatprep.subr.mxu0 0.0
    %1095 = vmatpush1.msra.mxu0 0.0
    %1096 = vmatprep.subr.mxu0 0.0
    %1097 = vmatpush1.msra.mxu0 0.0
    %1098 = vmatprep.subr.mxu0 0.0
    %1099 = vmatpush1.msra.mxu0 0.0
    %1100 = vmatprep.subr.mxu0 0.0
    %1101 = vmatpush1.msra.mxu0 0.0
    %1102 = vmatprep.subr.mxu0 %v1058
    %1103 = vmatpush1.msra.mxu0 %v1055
    %1104 = vmatprep.subr.mxu0 0.0
    %1105 = vmatpush2.msra.mxu0 0.0
    %1106 = vmatprep.subr.mxu0 0.0
    %1107 = vmatpush2.msra.mxu0 0.0
    %1108 = vmatprep.subr.mxu0 0.0
    %1109 = vmatpush2.msra.mxu0 0.0
    %1110 = vmatprep.subr.mxu0 0.0
    %1111 = vmatpush2.msra.mxu0 0.0
    %1112 = vmatprep.subr.mxu0 0.0
    %1113 = vmatpush2.msra.mxu0 0.0
    %1114 = vmatprep.subr.mxu0 0.0
    %1115 = vmatpush2.msra.mxu0 0.0
    %1116 = vmatprep.subr.mxu0 0.0
    %1117 = vmatpush2.msra.mxu0 0.0
    %1118 = vmatprep.subr.mxu0 0.0
    %1119 = vmatpush2.msra.mxu0 0.0
    %1120 = vmatprep.subr.mxu0 0.0
    %1121 = vmatpush2.msra.mxu0 0.0
    %1122 = vmatprep.subr.mxu0 0.0
    %1123 = vmatpush2.msra.mxu0 0.0
    %1124 = vmatprep.subr.mxu0 0.0
    %1125 = vmatpush2.msra.mxu0 0.0
    %1126 = vmatprep.subr.mxu0 0.0
    %1127 = vmatpush2.msra.mxu0 0.0
    %1128 = vmatprep.subr.mxu0 0.0
    %1129 = vmatpush2.msra.mxu0 0.0
    %1130 = vmatprep.subr.mxu0 0.0
    %1131 = vmatpush2.msra.mxu0 0.0
    %1132 = vmatprep.subr.mxu0 0.0
    %1133 = vmatpush2.msra.mxu0 0.0
    %1134 = vmatprep.subr.mxu0 0.0
    %1135 = vmatpush2.msra.mxu0 0.0
    %1136 = vmatprep.mubr.f32.mxu0 0.0
    %1137 = vmatmul.mubr.f32.gmra.mxu0 %v1052
    %v1138 = vpop.f32.mrf.mxu0
    %v1139 = vadd.f32 0.0, %v1138
    %v1140 = vpop.f32.mrf.mxu0
    %v1141 = vadd.f32 0.0, %v1140
    %1142 = vdwg.mxu0
    %1143 = vmatprep.subr.mxu0 0.0
    %1144 = vmatpush1.msra.mxu0 0.0
    %1145 = vmatprep.subr.mxu0 0.0
    %1146 = vmatpush1.msra.mxu0 0.0
    %1147 = vmatprep.subr.mxu0 0.0
    %1148 = vmatpush1.msra.mxu0 0.0
    %1149 = vmatprep.subr.mxu0 0.0
    %1150 = vmatpush1.msra.mxu0 0.0
    %1151 = vmatprep.subr.mxu0 0.0
    %1152 = vmatpush1.msra.mxu0 0.0
    %1153 = vmatprep.subr.mxu0 0.0
    %1154 = vmatpush1.msra.mxu0 0.0
    %1155 = vmatprep.subr.mxu0 0.0
    %1156 = vmatpush1.msra.mxu0 0.0
    %1157 = vmatprep.subr.mxu0 0.0
    %1158 = vmatpush1.msra.mxu0 0.0
    %1159 = vmatprep.subr.mxu0 0.0
    %1160 = vmatpush1.msra.mxu0 0.0
    %1161 = vmatprep.subr.mxu0 0.0
    %1162 = vmatpush1.msra.mxu0 0.0
    %1163 = vmatprep.subr.mxu0 0.0
    %1164 = vmatpush1.msra.mxu0 0.0
    %1165 = vmatprep.subr.mxu0 0.0
    %1166 = vmatpush1.msra.mxu0 0.0
    %1167 = vmatprep.subr.mxu0 0.0
    %1168 = vmatpush1.msra.mxu0 0.0
    %1169 = vmatprep.subr.mxu0 0.0
    %1170 = vmatpush1.msra.mxu0 0.0
    %1171 = vmatprep.subr.mxu0 0.0
    %1172 = vmatpush1.msra.mxu0 0.0
    %1173 = vmatprep.subr.mxu0 %v1064
    %1174 = vmatpush1.msra.mxu0 %v1061
    %1175 = vmatprep.subr.mxu0 0.0
    %1176 = vmatpush2.msra.mxu0 0.0
    %1177 = vmatprep.subr.mxu0 0.0
    %1178 = vmatpush2.msra.mxu0 0.0
    %1179 = vmatprep.subr.mxu0 0.0
    %1180 = vmatpush2.msra.mxu0 0.0
    %1181 = vmatprep.subr.mxu0 0.0
    %1182 = vmatpush2.msra.mxu0 0.0
    %1183 = vmatprep.subr.mxu0 0.0
    %1184 = vmatpush2.msra.mxu0 0.0
    %1185 = vmatprep.subr.mxu0 0.0
    %1186 = vmatpush2.msra.mxu0 0.0
    %1187 = vmatprep.subr.mxu0 0.0
    %1188 = vmatpush2.msra.mxu0 0.0
    %1189 = vmatprep.subr.mxu0 0.0
    %1190 = vmatpush2.msra.mxu0 0.0
    %1191 = vmatprep.subr.mxu0 0.0
    %1192 = vmatpush2.msra.mxu0 0.0
    %1193 = vmatprep.subr.mxu0 0.0
    %1194 = vmatpush2.msra.mxu0 0.0
    %1195 = vmatprep.subr.mxu0 0.0
    %1196 = vmatpush2.msra.mxu0 0.0
    %1197 = vmatprep.subr.mxu0 0.0
    %1198 = vmatpush2.msra.mxu0 0.0
    %1199 = vmatprep.subr.mxu0 0.0
    %1200 = vmatpush2.msra.mxu0 0.0
    %1201 = vmatprep.subr.mxu0 0.0
    %1202 = vmatpush2.msra.mxu0 0.0
    %1203 = vmatprep.subr.mxu0 0.0
    %1204 = vmatpush2.msra.mxu0 0.0
    %1205 = vmatprep.subr.mxu0 0.0
    %1206 = vmatpush2.msra.mxu0 0.0
    %1207 = vmatprep.mubr.f32.mxu0 0.0
    %1208 = vmatmul.mubr.f32.gmra.mxu0 %v1052
    %v1209 = vpop.f32.mrf.mxu0
    %v1210 = vadd.f32 0.0, %v1209
    %v1211 = vpop.f32.mrf.mxu0
    %v1212 = vadd.f32 0.0, %v1211
    %1213 = vdwg.mxu0
    %1214 = vmatprep.subr.mxu0 0.0
    %1215 = vmatpush1.msra.mxu0 0.0
    %1216 = vmatprep.subr.mxu0 0.0
    %1217 = vmatpush1.msra.mxu0 0.0
    %1218 = vmatprep.subr.mxu0 0.0
    %1219 = vmatpush1.msra.mxu0 0.0
    %1220 = vmatprep.subr.mxu0 0.0
    %1221 = vmatpush1.msra.mxu0 0.0
    %1222 = vmatprep.subr.mxu0 0.0
    %1223 = vmatpush1.msra.mxu0 0.0
    %1224 = vmatprep.subr.mxu0 0.0
    %1225 = vmatpush1.msra.mxu0 0.0
    %1226 = vmatprep.subr.mxu0 0.0
    %1227 = vmatpush1.msra.mxu0 0.0
    %1228 = vmatprep.subr.mxu0 0.0
    %1229 = vmatpush1.msra.mxu0 0.0
    %1230 = vmatprep.subr.mxu0 0.0
    %1231 = vmatpush1.msra.mxu0 0.0
    %1232 = vmatprep.subr.mxu0 0.0
    %1233 = vmatpush1.msra.mxu0 0.0
    %1234 = vmatprep.subr.mxu0 0.0
    %1235 = vmatpush1.msra.mxu0 0.0
    %1236 = vmatprep.subr.mxu0 0.0
    %1237 = vmatpush1.msra.mxu0 0.0
    %1238 = vmatprep.subr.mxu0 0.0
    %1239 = vmatpush1.msra.mxu0 0.0
    %1240 = vmatprep.subr.mxu0 0.0
    %1241 = vmatpush1.msra.mxu0 0.0
    %1242 = vmatprep.subr.mxu0 0.0
    %1243 = vmatpush1.msra.mxu0 0.0
    %1244 = vmatprep.subr.mxu0 %v1070
    %1245 = vmatpush1.msra.mxu0 %v1067
    %1246 = vmatprep.subr.mxu0 0.0
    %1247 = vmatpush2.msra.mxu0 0.0
    %1248 = vmatprep.subr.mxu0 0.0
    %1249 = vmatpush2.msra.mxu0 0.0
    %1250 = vmatprep.subr.mxu0 0.0
    %1251 = vmatpush2.msra.mxu0 0.0
    %1252 = vmatprep.subr.mxu0 0.0
    %1253 = vmatpush2.msra.mxu0 0.0
    %1254 = vmatprep.subr.mxu0 0.0
    %1255 = vmatpush2.msra.mxu0 0.0
    %1256 = vmatprep.subr.mxu0 0.0
    %1257 = vmatpush2.msra.mxu0 0.0
    %1258 = vmatprep.subr.mxu0 0.0
    %1259 = vmatpush2.msra.mxu0 0.0
    %1260 = vmatprep.subr.mxu0 0.0
    %1261 = vmatpush2.msra.mxu0 0.0
    %1262 = vmatprep.subr.mxu0 0.0
    %1263 = vmatpush2.msra.mxu0 0.0
    %1264 = vmatprep.subr.mxu0 0.0
    %1265 = vmatpush2.msra.mxu0 0.0
    %1266 = vmatprep.subr.mxu0 0.0
    %1267 = vmatpush2.msra.mxu0 0.0
    %1268 = vmatprep.subr.mxu0 0.0
    %1269 = vmatpush2.msra.mxu0 0.0
    %1270 = vmatprep.subr.mxu0 0.0
    %1271 = vmatpush2.msra.mxu0 0.0
    %1272 = vmatprep.subr.mxu0 0.0
    %1273 = vmatpush2.msra.mxu0 0.0
    %1274 = vmatprep.subr.mxu0 0.0
    %1275 = vmatpush2.msra.mxu0 0.0
    %1276 = vmatprep.subr.mxu0 0.0
    %1277 = vmatpush2.msra.mxu0 0.0
    %1278 = vmatprep.mubr.f32.mxu0 0.0
    %1279 = vmatmul.mubr.f32.gmra.mxu0 %v1052
    %v1280 = vpop.f32.mrf.mxu0
    %v1281 = vadd.f32 0.0, %v1280
    %v1282 = vpop.f32.mrf.mxu0
    %v1283 = vadd.f32 0.0, %v1282
    %1284 = vdwg.mxu0
    %v1285 = vadd.f32 %v1025, %v1139
    %v1286 = vadd.f32 %v1026, %v1141
    %v1287 = vadd.f32 %v1027, %v1210
    %v1288 = vadd.f32 %v1028, %v1212
    %v1289 = vadd.f32 %v1029, %v1281
    %v1290 = vadd.f32 %v1030, %v1283
    %1291 = vrot.lane.b32.xlu0 %v12, 108
    %v1292 = vpop.permute.xlu0 %1291
    %1293 = vrot.lane.b32.xlu0 %v19, 108
    %v1294 = vpop.permute.xlu0 %1293
    %1295 = vrot.lane.b32.xlu0 %v13, 108
    %v1296 = vpop.permute.xlu0 %1295
    %1297 = vrot.lane.b32.xlu0 %v20, 108
    %v1298 = vpop.permute.xlu0 %1297
    %1299 = vrot.lane.b32.xlu0 %v14, 108
    %v1300 = vpop.permute.xlu0 %1299
    %1301 = vrot.lane.b32.xlu0 %v21, 108
    %v1302 = vpop.permute.xlu0 %1301
    %vm1303 = vcmp.lt.s32.totalorder %v38, 108
    %v1304 = vsel %vm1303, %v1300, %v1302
    %v1305 = vsel %vm1303, %v1298, %v1300
    %v1306 = vsel %vm1303, %v1296, %v1298
    %v1307 = vsel %vm1303, %v1294, %v1296
    %v1308 = vsel %vm1303, %v1292, %v1294
    %v1309 = vsel %vm1303, %v1302, %v1292
    %v1310 = vld [vmem:[%s1 + $0x28] sm:$0xff]
    %v1312 = vsel %vm47, %v1310, 0
    %v1315 = vsel %vm51, %v1308, 0
    %v1318 = vsel %vm51, %v1307, 0
    %v1321 = vsel %vm51, %v1306, 0
    %v1324 = vsel %vm51, %v1305, 0
    %v1327 = vsel %vm51, %v1304, 0
    %v1330 = vsel %vm51, %v1309, 0
    %1332 = vmatprep.subr.mxu0 0.0
    %1333 = vmatpush1.msra.mxu0 0.0
    %1334 = vmatprep.subr.mxu0 0.0
    %1335 = vmatpush1.msra.mxu0 0.0
    %1336 = vmatprep.subr.mxu0 0.0
    %1337 = vmatpush1.msra.mxu0 0.0
    %1338 = vmatprep.subr.mxu0 0.0
    %1339 = vmatpush1.msra.mxu0 0.0
    %1340 = vmatprep.subr.mxu0 0.0
    %1341 = vmatpush1.msra.mxu0 0.0
    %1342 = vmatprep.subr.mxu0 0.0
    %1343 = vmatpush1.msra.mxu0 0.0
    %1344 = vmatprep.subr.mxu0 0.0
    %1345 = vmatpush1.msra.mxu0 0.0
    %1346 = vmatprep.subr.mxu0 0.0
    %1347 = vmatpush1.msra.mxu0 0.0
    %1348 = vmatprep.subr.mxu0 0.0
    %1349 = vmatpush1.msra.mxu0 0.0
    %1350 = vmatprep.subr.mxu0 0.0
    %1351 = vmatpush1.msra.mxu0 0.0
    %1352 = vmatprep.subr.mxu0 0.0
    %1353 = vmatpush1.msra.mxu0 0.0
    %1354 = vmatprep.subr.mxu0 0.0
    %1355 = vmatpush1.msra.mxu0 0.0
    %1356 = vmatprep.subr.mxu0 0.0
    %1357 = vmatpush1.msra.mxu0 0.0
    %1358 = vmatprep.subr.mxu0 0.0
    %1359 = vmatpush1.msra.mxu0 0.0
    %1360 = vmatprep.subr.mxu0 0.0
    %1361 = vmatpush1.msra.mxu0 0.0
    %1362 = vmatprep.subr.mxu0 %v1318
    %1363 = vmatpush1.msra.mxu0 %v1315
    %1364 = vmatprep.subr.mxu0 0.0
    %1365 = vmatpush2.msra.mxu0 0.0
    %1366 = vmatprep.subr.mxu0 0.0
    %1367 = vmatpush2.msra.mxu0 0.0
    %1368 = vmatprep.subr.mxu0 0.0
    %1369 = vmatpush2.msra.mxu0 0.0
    %1370 = vmatprep.subr.mxu0 0.0
    %1371 = vmatpush2.msra.mxu0 0.0
    %1372 = vmatprep.subr.mxu0 0.0
    %1373 = vmatpush2.msra.mxu0 0.0
    %1374 = vmatprep.subr.mxu0 0.0
    %1375 = vmatpush2.msra.mxu0 0.0
    %1376 = vmatprep.subr.mxu0 0.0
    %1377 = vmatpush2.msra.mxu0 0.0
    %1378 = vmatprep.subr.mxu0 0.0
    %1379 = vmatpush2.msra.mxu0 0.0
    %1380 = vmatprep.subr.mxu0 0.0
    %1381 = vmatpush2.msra.mxu0 0.0
    %1382 = vmatprep.subr.mxu0 0.0
    %1383 = vmatpush2.msra.mxu0 0.0
    %1384 = vmatprep.subr.mxu0 0.0
    %1385 = vmatpush2.msra.mxu0 0.0
    %1386 = vmatprep.subr.mxu0 0.0
    %1387 = vmatpush2.msra.mxu0 0.0
    %1388 = vmatprep.subr.mxu0 0.0
    %1389 = vmatpush2.msra.mxu0 0.0
    %1390 = vmatprep.subr.mxu0 0.0
    %1391 = vmatpush2.msra.mxu0 0.0
    %1392 = vmatprep.subr.mxu0 0.0
    %1393 = vmatpush2.msra.mxu0 0.0
    %1394 = vmatprep.subr.mxu0 0.0
    %1395 = vmatpush2.msra.mxu0 0.0
    %1396 = vmatprep.mubr.f32.mxu0 0.0
    %1397 = vmatmul.mubr.f32.gmra.mxu0 %v1312
    %v1398 = vpop.f32.mrf.mxu0
    %v1399 = vadd.f32 0.0, %v1398
    %v1400 = vpop.f32.mrf.mxu0
    %v1401 = vadd.f32 0.0, %v1400
    %1402 = vdwg.mxu0
    %1403 = vmatprep.subr.mxu0 0.0
    %1404 = vmatpush1.msra.mxu0 0.0
    %1405 = vmatprep.subr.mxu0 0.0
    %1406 = vmatpush1.msra.mxu0 0.0
    %1407 = vmatprep.subr.mxu0 0.0
    %1408 = vmatpush1.msra.mxu0 0.0
    %1409 = vmatprep.subr.mxu0 0.0
    %1410 = vmatpush1.msra.mxu0 0.0
    %1411 = vmatprep.subr.mxu0 0.0
    %1412 = vmatpush1.msra.mxu0 0.0
    %1413 = vmatprep.subr.mxu0 0.0
    %1414 = vmatpush1.msra.mxu0 0.0
    %1415 = vmatprep.subr.mxu0 0.0
    %1416 = vmatpush1.msra.mxu0 0.0
    %1417 = vmatprep.subr.mxu0 0.0
    %1418 = vmatpush1.msra.mxu0 0.0
    %1419 = vmatprep.subr.mxu0 0.0
    %1420 = vmatpush1.msra.mxu0 0.0
    %1421 = vmatprep.subr.mxu0 0.0
    %1422 = vmatpush1.msra.mxu0 0.0
    %1423 = vmatprep.subr.mxu0 0.0
    %1424 = vmatpush1.msra.mxu0 0.0
    %1425 = vmatprep.subr.mxu0 0.0
    %1426 = vmatpush1.msra.mxu0 0.0
    %1427 = vmatprep.subr.mxu0 0.0
    %1428 = vmatpush1.msra.mxu0 0.0
    %1429 = vmatprep.subr.mxu0 0.0
    %1430 = vmatpush1.msra.mxu0 0.0
    %1431 = vmatprep.subr.mxu0 0.0
    %1432 = vmatpush1.msra.mxu0 0.0
    %1433 = vmatprep.subr.mxu0 %v1324
    %1434 = vmatpush1.msra.mxu0 %v1321
    %1435 = vmatprep.subr.mxu0 0.0
    %1436 = vmatpush2.msra.mxu0 0.0
    %1437 = vmatprep.subr.mxu0 0.0
    %1438 = vmatpush2.msra.mxu0 0.0
    %1439 = vmatprep.subr.mxu0 0.0
    %1440 = vmatpush2.msra.mxu0 0.0
    %1441 = vmatprep.subr.mxu0 0.0
    %1442 = vmatpush2.msra.mxu0 0.0
    %1443 = vmatprep.subr.mxu0 0.0
    %1444 = vmatpush2.msra.mxu0 0.0
    %1445 = vmatprep.subr.mxu0 0.0
    %1446 = vmatpush2.msra.mxu0 0.0
    %1447 = vmatprep.subr.mxu0 0.0
    %1448 = vmatpush2.msra.mxu0 0.0
    %1449 = vmatprep.subr.mxu0 0.0
    %1450 = vmatpush2.msra.mxu0 0.0
    %1451 = vmatprep.subr.mxu0 0.0
    %1452 = vmatpush2.msra.mxu0 0.0
    %1453 = vmatprep.subr.mxu0 0.0
    %1454 = vmatpush2.msra.mxu0 0.0
    %1455 = vmatprep.subr.mxu0 0.0
    %1456 = vmatpush2.msra.mxu0 0.0
    %1457 = vmatprep.subr.mxu0 0.0
    %1458 = vmatpush2.msra.mxu0 0.0
    %1459 = vmatprep.subr.mxu0 0.0
    %1460 = vmatpush2.msra.mxu0 0.0
    %1461 = vmatprep.subr.mxu0 0.0
    %1462 = vmatpush2.msra.mxu0 0.0
    %1463 = vmatprep.subr.mxu0 0.0
    %1464 = vmatpush2.msra.mxu0 0.0
    %1465 = vmatprep.subr.mxu0 0.0
    %1466 = vmatpush2.msra.mxu0 0.0
    %1467 = vmatprep.mubr.f32.mxu0 0.0
    %1468 = vmatmul.mubr.f32.gmra.mxu0 %v1312
    %v1469 = vpop.f32.mrf.mxu0
    %v1470 = vadd.f32 0.0, %v1469
    %v1471 = vpop.f32.mrf.mxu0
    %v1472 = vadd.f32 0.0, %v1471
    %1473 = vdwg.mxu0
    %1474 = vmatprep.subr.mxu0 0.0
    %1475 = vmatpush1.msra.mxu0 0.0
    %1476 = vmatprep.subr.mxu0 0.0
    %1477 = vmatpush1.msra.mxu0 0.0
    %1478 = vmatprep.subr.mxu0 0.0
    %1479 = vmatpush1.msra.mxu0 0.0
    %1480 = vmatprep.subr.mxu0 0.0
    %1481 = vmatpush1.msra.mxu0 0.0
    %1482 = vmatprep.subr.mxu0 0.0
    %1483 = vmatpush1.msra.mxu0 0.0
    %1484 = vmatprep.subr.mxu0 0.0
    %1485 = vmatpush1.msra.mxu0 0.0
    %1486 = vmatprep.subr.mxu0 0.0
    %1487 = vmatpush1.msra.mxu0 0.0
    %1488 = vmatprep.subr.mxu0 0.0
    %1489 = vmatpush1.msra.mxu0 0.0
    %1490 = vmatprep.subr.mxu0 0.0
    %1491 = vmatpush1.msra.mxu0 0.0
    %1492 = vmatprep.subr.mxu0 0.0
    %1493 = vmatpush1.msra.mxu0 0.0
    %1494 = vmatprep.subr.mxu0 0.0
    %1495 = vmatpush1.msra.mxu0 0.0
    %1496 = vmatprep.subr.mxu0 0.0
    %1497 = vmatpush1.msra.mxu0 0.0
    %1498 = vmatprep.subr.mxu0 0.0
    %1499 = vmatpush1.msra.mxu0 0.0
    %1500 = vmatprep.subr.mxu0 0.0
    %1501 = vmatpush1.msra.mxu0 0.0
    %1502 = vmatprep.subr.mxu0 0.0
    %1503 = vmatpush1.msra.mxu0 0.0
    %1504 = vmatprep.subr.mxu0 %v1330
    %1505 = vmatpush1.msra.mxu0 %v1327
    %1506 = vmatprep.subr.mxu0 0.0
    %1507 = vmatpush2.msra.mxu0 0.0
    %1508 = vmatprep.subr.mxu0 0.0
    %1509 = vmatpush2.msra.mxu0 0.0
    %1510 = vmatprep.subr.mxu0 0.0
    %1511 = vmatpush2.msra.mxu0 0.0
    %1512 = vmatprep.subr.mxu0 0.0
    %1513 = vmatpush2.msra.mxu0 0.0
    %1514 = vmatprep.subr.mxu0 0.0
    %1515 = vmatpush2.msra.mxu0 0.0
    %1516 = vmatprep.subr.mxu0 0.0
    %1517 = vmatpush2.msra.mxu0 0.0
    %1518 = vmatprep.subr.mxu0 0.0
    %1519 = vmatpush2.msra.mxu0 0.0
    %1520 = vmatprep.subr.mxu0 0.0
    %1521 = vmatpush2.msra.mxu0 0.0
    %1522 = vmatprep.subr.mxu0 0.0
    %1523 = vmatpush2.msra.mxu0 0.0
    %1524 = vmatprep.subr.mxu0 0.0
    %1525 = vmatpush2.msra.mxu0 0.0
    %1526 = vmatprep.subr.mxu0 0.0
    %1527 = vmatpush2.msra.mxu0 0.0
    %1528 = vmatprep.subr.mxu0 0.0
    %1529 = vmatpush2.msra.mxu0 0.0
    %1530 = vmatprep.subr.mxu0 0.0
    %1531 = vmatpush2.msra.mxu0 0.0
    %1532 = vmatprep.subr.mxu0 0.0
    %1533 = vmatpush2.msra.mxu0 0.0
    %1534 = vmatprep.subr.mxu0 0.0
    %1535 = vmatpush2.msra.mxu0 0.0
    %1536 = vmatprep.subr.mxu0 0.0
    %1537 = vmatpush2.msra.mxu0 0.0
    %1538 = vmatprep.mubr.f32.mxu0 0.0
    %1539 = vmatmul.mubr.f32.gmra.mxu0 %v1312
    %v1540 = vpop.f32.mrf.mxu0
    %v1541 = vadd.f32 0.0, %v1540
    %v1542 = vpop.f32.mrf.mxu0
    %v1543 = vadd.f32 0.0, %v1542
    %1544 = vdwg.mxu0
    %v1545 = vadd.f32 %v1285, %v1399
    %v1546 = vadd.f32 %v1286, %v1401
    %v1547 = vadd.f32 %v1287, %v1470
    %v1548 = vadd.f32 %v1288, %v1472
    %v1549 = vadd.f32 %v1289, %v1541
    %v1550 = vadd.f32 %v1290, %v1543
    %1551 = vrot.lane.b32.xlu0 %v12, 92
    %v1552 = vpop.permute.xlu0 %1551
    %1553 = vrot.lane.b32.xlu0 %v19, 92
    %v1554 = vpop.permute.xlu0 %1553
    %1555 = vrot.lane.b32.xlu0 %v13, 92
    %v1556 = vpop.permute.xlu0 %1555
    %1557 = vrot.lane.b32.xlu0 %v20, 92
    %v1558 = vpop.permute.xlu0 %1557
    %1559 = vrot.lane.b32.xlu0 %v14, 92
    %v1560 = vpop.permute.xlu0 %1559
    %1561 = vrot.lane.b32.xlu0 %v21, 92
    %v1562 = vpop.permute.xlu0 %1561
    %vm1563 = vcmp.lt.s32.totalorder %v38, 92
    %v1564 = vsel %vm1563, %v1560, %v1562
    %v1565 = vsel %vm1563, %v1558, %v1560
    %v1566 = vsel %vm1563, %v1556, %v1558
    %v1567 = vsel %vm1563, %v1554, %v1556
    %v1568 = vsel %vm1563, %v1552, %v1554
    %v1569 = vsel %vm1563, %v1562, %v1552
    %v1570 = vld [vmem:[%s1 + $0x30] sm:$0xff]
    %v1572 = vsel %vm47, %v1570, 0
    %v1575 = vsel %vm51, %v1568, 0
    %v1578 = vsel %vm51, %v1567, 0
    %v1581 = vsel %vm51, %v1566, 0
    %v1584 = vsel %vm51, %v1565, 0
    %v1587 = vsel %vm51, %v1564, 0
    %v1590 = vsel %vm51, %v1569, 0
    %1592 = vmatprep.subr.mxu0 0.0
    %1593 = vmatpush1.msra.mxu0 0.0
    %1594 = vmatprep.subr.mxu0 0.0
    %1595 = vmatpush1.msra.mxu0 0.0
    %1596 = vmatprep.subr.mxu0 0.0
    %1597 = vmatpush1.msra.mxu0 0.0
    %1598 = vmatprep.subr.mxu0 0.0
    %1599 = vmatpush1.msra.mxu0 0.0
    %1600 = vmatprep.subr.mxu0 0.0
    %1601 = vmatpush1.msra.mxu0 0.0
    %1602 = vmatprep.subr.mxu0 0.0
    %1603 = vmatpush1.msra.mxu0 0.0
    %1604 = vmatprep.subr.mxu0 0.0
    %1605 = vmatpush1.msra.mxu0 0.0
    %1606 = vmatprep.subr.mxu0 0.0
    %1607 = vmatpush1.msra.mxu0 0.0
    %1608 = vmatprep.subr.mxu0 0.0
    %1609 = vmatpush1.msra.mxu0 0.0
    %1610 = vmatprep.subr.mxu0 0.0
    %1611 = vmatpush1.msra.mxu0 0.0
    %1612 = vmatprep.subr.mxu0 0.0
    %1613 = vmatpush1.msra.mxu0 0.0
    %1614 = vmatprep.subr.mxu0 0.0
    %1615 = vmatpush1.msra.mxu0 0.0
    %1616 = vmatprep.subr.mxu0 0.0
    %1617 = vmatpush1.msra.mxu0 0.0
    %1618 = vmatprep.subr.mxu0 0.0
    %1619 = vmatpush1.msra.mxu0 0.0
    %1620 = vmatprep.subr.mxu0 0.0
    %1621 = vmatpush1.msra.mxu0 0.0
    %1622 = vmatprep.subr.mxu0 %v1578
    %1623 = vmatpush1.msra.mxu0 %v1575
    %1624 = vmatprep.subr.mxu0 0.0
    %1625 = vmatpush2.msra.mxu0 0.0
    %1626 = vmatprep.subr.mxu0 0.0
    %1627 = vmatpush2.msra.mxu0 0.0
    %1628 = vmatprep.subr.mxu0 0.0
    %1629 = vmatpush2.msra.mxu0 0.0
    %1630 = vmatprep.subr.mxu0 0.0
    %1631 = vmatpush2.msra.mxu0 0.0
    %1632 = vmatprep.subr.mxu0 0.0
    %1633 = vmatpush2.msra.mxu0 0.0
    %1634 = vmatprep.subr.mxu0 0.0
    %1635 = vmatpush2.msra.mxu0 0.0
    %1636 = vmatprep.subr.mxu0 0.0
    %1637 = vmatpush2.msra.mxu0 0.0
    %1638 = vmatprep.subr.mxu0 0.0
    %1639 = vmatpush2.msra.mxu0 0.0
    %1640 = vmatprep.subr.mxu0 0.0
    %1641 = vmatpush2.msra.mxu0 0.0
    %1642 = vmatprep.subr.mxu0 0.0
    %1643 = vmatpush2.msra.mxu0 0.0
    %1644 = vmatprep.subr.mxu0 0.0
    %1645 = vmatpush2.msra.mxu0 0.0
    %1646 = vmatprep.subr.mxu0 0.0
    %1647 = vmatpush2.msra.mxu0 0.0
    %1648 = vmatprep.subr.mxu0 0.0
    %1649 = vmatpush2.msra.mxu0 0.0
    %1650 = vmatprep.subr.mxu0 0.0
    %1651 = vmatpush2.msra.mxu0 0.0
    %1652 = vmatprep.subr.mxu0 0.0
    %1653 = vmatpush2.msra.mxu0 0.0
    %1654 = vmatprep.subr.mxu0 0.0
    %1655 = vmatpush2.msra.mxu0 0.0
    %1656 = vmatprep.mubr.f32.mxu0 0.0
    %1657 = vmatmul.mubr.f32.gmra.mxu0 %v1572
    %v1658 = vpop.f32.mrf.mxu0
    %v1659 = vadd.f32 0.0, %v1658
    %v1660 = vpop.f32.mrf.mxu0
    %v1661 = vadd.f32 0.0, %v1660
    %1662 = vdwg.mxu0
    %1663 = vmatprep.subr.mxu0 0.0
    %1664 = vmatpush1.msra.mxu0 0.0
    %1665 = vmatprep.subr.mxu0 0.0
    %1666 = vmatpush1.msra.mxu0 0.0
    %1667 = vmatprep.subr.mxu0 0.0
    %1668 = vmatpush1.msra.mxu0 0.0
    %1669 = vmatprep.subr.mxu0 0.0
    %1670 = vmatpush1.msra.mxu0 0.0
    %1671 = vmatprep.subr.mxu0 0.0
    %1672 = vmatpush1.msra.mxu0 0.0
    %1673 = vmatprep.subr.mxu0 0.0
    %1674 = vmatpush1.msra.mxu0 0.0
    %1675 = vmatprep.subr.mxu0 0.0
    %1676 = vmatpush1.msra.mxu0 0.0
    %1677 = vmatprep.subr.mxu0 0.0
    %1678 = vmatpush1.msra.mxu0 0.0
    %1679 = vmatprep.subr.mxu0 0.0
    %1680 = vmatpush1.msra.mxu0 0.0
    %1681 = vmatprep.subr.mxu0 0.0
    %1682 = vmatpush1.msra.mxu0 0.0
    %1683 = vmatprep.subr.mxu0 0.0
    %1684 = vmatpush1.msra.mxu0 0.0
    %1685 = vmatprep.subr.mxu0 0.0
    %1686 = vmatpush1.msra.mxu0 0.0
    %1687 = vmatprep.subr.mxu0 0.0
    %1688 = vmatpush1.msra.mxu0 0.0
    %1689 = vmatprep.subr.mxu0 0.0
    %1690 = vmatpush1.msra.mxu0 0.0
    %1691 = vmatprep.subr.mxu0 0.0
    %1692 = vmatpush1.msra.mxu0 0.0
    %1693 = vmatprep.subr.mxu0 %v1584
    %1694 = vmatpush1.msra.mxu0 %v1581
    %1695 = vmatprep.subr.mxu0 0.0
    %1696 = vmatpush2.msra.mxu0 0.0
    %1697 = vmatprep.subr.mxu0 0.0
    %1698 = vmatpush2.msra.mxu0 0.0
    %1699 = vmatprep.subr.mxu0 0.0
    %1700 = vmatpush2.msra.mxu0 0.0
    %1701 = vmatprep.subr.mxu0 0.0
    %1702 = vmatpush2.msra.mxu0 0.0
    %1703 = vmatprep.subr.mxu0 0.0
    %1704 = vmatpush2.msra.mxu0 0.0
    %1705 = vmatprep.subr.mxu0 0.0
    %1706 = vmatpush2.msra.mxu0 0.0
    %1707 = vmatprep.subr.mxu0 0.0
    %1708 = vmatpush2.msra.mxu0 0.0
    %1709 = vmatprep.subr.mxu0 0.0
    %1710 = vmatpush2.msra.mxu0 0.0
    %1711 = vmatprep.subr.mxu0 0.0
    %1712 = vmatpush2.msra.mxu0 0.0
    %1713 = vmatprep.subr.mxu0 0.0
    %1714 = vmatpush2.msra.mxu0 0.0
    %1715 = vmatprep.subr.mxu0 0.0
    %1716 = vmatpush2.msra.mxu0 0.0
    %1717 = vmatprep.subr.mxu0 0.0
    %1718 = vmatpush2.msra.mxu0 0.0
    %1719 = vmatprep.subr.mxu0 0.0
    %1720 = vmatpush2.msra.mxu0 0.0
    %1721 = vmatprep.subr.mxu0 0.0
    %1722 = vmatpush2.msra.mxu0 0.0
    %1723 = vmatprep.subr.mxu0 0.0
    %1724 = vmatpush2.msra.mxu0 0.0
    %1725 = vmatprep.subr.mxu0 0.0
    %1726 = vmatpush2.msra.mxu0 0.0
    %1727 = vmatprep.mubr.f32.mxu0 0.0
    %1728 = vmatmul.mubr.f32.gmra.mxu0 %v1572
    %v1729 = vpop.f32.mrf.mxu0
    %v1730 = vadd.f32 0.0, %v1729
    %v1731 = vpop.f32.mrf.mxu0
    %v1732 = vadd.f32 0.0, %v1731
    %1733 = vdwg.mxu0
    %1734 = vmatprep.subr.mxu0 0.0
    %1735 = vmatpush1.msra.mxu0 0.0
    %1736 = vmatprep.subr.mxu0 0.0
    %1737 = vmatpush1.msra.mxu0 0.0
    %1738 = vmatprep.subr.mxu0 0.0
    %1739 = vmatpush1.msra.mxu0 0.0
    %1740 = vmatprep.subr.mxu0 0.0
    %1741 = vmatpush1.msra.mxu0 0.0
    %1742 = vmatprep.subr.mxu0 0.0
    %1743 = vmatpush1.msra.mxu0 0.0
    %1744 = vmatprep.subr.mxu0 0.0
    %1745 = vmatpush1.msra.mxu0 0.0
    %1746 = vmatprep.subr.mxu0 0.0
    %1747 = vmatpush1.msra.mxu0 0.0
    %1748 = vmatprep.subr.mxu0 0.0
    %1749 = vmatpush1.msra.mxu0 0.0
    %1750 = vmatprep.subr.mxu0 0.0
    %1751 = vmatpush1.msra.mxu0 0.0
    %1752 = vmatprep.subr.mxu0 0.0
    %1753 = vmatpush1.msra.mxu0 0.0
    %1754 = vmatprep.subr.mxu0 0.0
    %1755 = vmatpush1.msra.mxu0 0.0
    %1756 = vmatprep.subr.mxu0 0.0
    %1757 = vmatpush1.msra.mxu0 0.0
    %1758 = vmatprep.subr.mxu0 0.0
    %1759 = vmatpush1.msra.mxu0 0.0
    %1760 = vmatprep.subr.mxu0 0.0
    %1761 = vmatpush1.msra.mxu0 0.0
    %1762 = vmatprep.subr.mxu0 0.0
    %1763 = vmatpush1.msra.mxu0 0.0
    %1764 = vmatprep.subr.mxu0 %v1590
    %1765 = vmatpush1.msra.mxu0 %v1587
    %1766 = vmatprep.subr.mxu0 0.0
    %1767 = vmatpush2.msra.mxu0 0.0
    %1768 = vmatprep.subr.mxu0 0.0
    %1769 = vmatpush2.msra.mxu0 0.0
    %1770 = vmatprep.subr.mxu0 0.0
    %1771 = vmatpush2.msra.mxu0 0.0
    %1772 = vmatprep.subr.mxu0 0.0
    %1773 = vmatpush2.msra.mxu0 0.0
    %1774 = vmatprep.subr.mxu0 0.0
    %1775 = vmatpush2.msra.mxu0 0.0
    %1776 = vmatprep.subr.mxu0 0.0
    %1777 = vmatpush2.msra.mxu0 0.0
    %1778 = vmatprep.subr.mxu0 0.0
    %1779 = vmatpush2.msra.mxu0 0.0
    %1780 = vmatprep.subr.mxu0 0.0
    %1781 = vmatpush2.msra.mxu0 0.0
    %1782 = vmatprep.subr.mxu0 0.0
    %1783 = vmatpush2.msra.mxu0 0.0
    %1784 = vmatprep.subr.mxu0 0.0
    %1785 = vmatpush2.msra.mxu0 0.0
    %1786 = vmatprep.subr.mxu0 0.0
    %1787 = vmatpush2.msra.mxu0 0.0
    %1788 = vmatprep.subr.mxu0 0.0
    %1789 = vmatpush2.msra.mxu0 0.0
    %1790 = vmatprep.subr.mxu0 0.0
    %1791 = vmatpush2.msra.mxu0 0.0
    %1792 = vmatprep.subr.mxu0 0.0
    %1793 = vmatpush2.msra.mxu0 0.0
    %1794 = vmatprep.subr.mxu0 0.0
    %1795 = vmatpush2.msra.mxu0 0.0
    %1796 = vmatprep.subr.mxu0 0.0
    %1797 = vmatpush2.msra.mxu0 0.0
    %1798 = vmatprep.mubr.f32.mxu0 0.0
    %1799 = vmatmul.mubr.f32.gmra.mxu0 %v1572
    %v1800 = vpop.f32.mrf.mxu0
    %v1801 = vadd.f32 0.0, %v1800
    %v1802 = vpop.f32.mrf.mxu0
    %v1803 = vadd.f32 0.0, %v1802
    %1804 = vdwg.mxu0
    %v1805 = vadd.f32 %v1545, %v1659
    %v1806 = vadd.f32 %v1546, %v1661
    %v1807 = vadd.f32 %v1547, %v1730
    %v1808 = vadd.f32 %v1548, %v1732
    %v1809 = vadd.f32 %v1549, %v1801
    %v1810 = vadd.f32 %v1550, %v1803
    %1811 = vrot.lane.b32.xlu0 %v12, 91
    %v1812 = vpop.permute.xlu0 %1811
    %1813 = vrot.lane.b32.xlu0 %v19, 91
    %v1814 = vpop.permute.xlu0 %1813
    %1815 = vrot.lane.b32.xlu0 %v13, 91
    %v1816 = vpop.permute.xlu0 %1815
    %1817 = vrot.lane.b32.xlu0 %v20, 91
    %v1818 = vpop.permute.xlu0 %1817
    %1819 = vrot.lane.b32.xlu0 %v14, 91
    %v1820 = vpop.permute.xlu0 %1819
    %1821 = vrot.lane.b32.xlu0 %v21, 91
    %v1822 = vpop.permute.xlu0 %1821
    %vm1823 = vcmp.lt.s32.totalorder %v38, 91
    %v1824 = vsel %vm1823, %v1820, %v1822
    %v1825 = vsel %vm1823, %v1818, %v1820
    %v1826 = vsel %vm1823, %v1816, %v1818
    %v1827 = vsel %vm1823, %v1814, %v1816
    %v1828 = vsel %vm1823, %v1812, %v1814
    %v1829 = vsel %vm1823, %v1822, %v1812
    %v1830 = vld [vmem:[%s1 + $0x38] sm:$0xff]
    %v1832 = vsel %vm47, %v1830, 0
    %v1835 = vsel %vm51, %v1828, 0
    %v1838 = vsel %vm51, %v1827, 0
    %v1841 = vsel %vm51, %v1826, 0
    %v1844 = vsel %vm51, %v1825, 0
    %v1847 = vsel %vm51, %v1824, 0
    %v1850 = vsel %vm51, %v1829, 0
    %1852 = vmatprep.subr.mxu0 0.0
    %1853 = vmatpush1.msra.mxu0 0.0
    %1854 = vmatprep.subr.mxu0 0.0
    %1855 = vmatpush1.msra.mxu0 0.0
    %1856 = vmatprep.subr.mxu0 0.0
    %1857 = vmatpush1.msra.mxu0 0.0
    %1858 = vmatprep.subr.mxu0 0.0
    %1859 = vmatpush1.msra.mxu0 0.0
    %1860 = vmatprep.subr.mxu0 0.0
    %1861 = vmatpush1.msra.mxu0 0.0
    %1862 = vmatprep.subr.mxu0 0.0
    %1863 = vmatpush1.msra.mxu0 0.0
    %1864 = vmatprep.subr.mxu0 0.0
    %1865 = vmatpush1.msra.mxu0 0.0
    %1866 = vmatprep.subr.mxu0 0.0
    %1867 = vmatpush1.msra.mxu0 0.0
    %1868 = vmatprep.subr.mxu0 0.0
    %1869 = vmatpush1.msra.mxu0 0.0
    %1870 = vmatprep.subr.mxu0 0.0
    %1871 = vmatpush1.msra.mxu0 0.0
    %1872 = vmatprep.subr.mxu0 0.0
    %1873 = vmatpush1.msra.mxu0 0.0
    %1874 = vmatprep.subr.mxu0 0.0
    %1875 = vmatpush1.msra.mxu0 0.0
    %1876 = vmatprep.subr.mxu0 0.0
    %1877 = vmatpush1.msra.mxu0 0.0
    %1878 = vmatprep.subr.mxu0 0.0
    %1879 = vmatpush1.msra.mxu0 0.0
    %1880 = vmatprep.subr.mxu0 0.0
    %1881 = vmatpush1.msra.mxu0 0.0
    %1882 = vmatprep.subr.mxu0 %v1838
    %1883 = vmatpush1.msra.mxu0 %v1835
    %1884 = vmatprep.subr.mxu0 0.0
    %1885 = vmatpush2.msra.mxu0 0.0
    %1886 = vmatprep.subr.mxu0 0.0
    %1887 = vmatpush2.msra.mxu0 0.0
    %1888 = vmatprep.subr.mxu0 0.0
    %1889 = vmatpush2.msra.mxu0 0.0
    %1890 = vmatprep.subr.mxu0 0.0
    %1891 = vmatpush2.msra.mxu0 0.0
    %1892 = vmatprep.subr.mxu0 0.0
    %1893 = vmatpush2.msra.mxu0 0.0
    %1894 = vmatprep.subr.mxu0 0.0
    %1895 = vmatpush2.msra.mxu0 0.0
    %1896 = vmatprep.subr.mxu0 0.0
    %1897 = vmatpush2.msra.mxu0 0.0
    %1898 = vmatprep.subr.mxu0 0.0
    %1899 = vmatpush2.msra.mxu0 0.0
    %1900 = vmatprep.subr.mxu0 0.0
    %1901 = vmatpush2.msra.mxu0 0.0
    %1902 = vmatprep.subr.mxu0 0.0
    %1903 = vmatpush2.msra.mxu0 0.0
    %1904 = vmatprep.subr.mxu0 0.0
    %1905 = vmatpush2.msra.mxu0 0.0
    %1906 = vmatprep.subr.mxu0 0.0
    %1907 = vmatpush2.msra.mxu0 0.0
    %1908 = vmatprep.subr.mxu0 0.0
    %1909 = vmatpush2.msra.mxu0 0.0
    %1910 = vmatprep.subr.mxu0 0.0
    %1911 = vmatpush2.msra.mxu0 0.0
    %1912 = vmatprep.subr.mxu0 0.0
    %1913 = vmatpush2.msra.mxu0 0.0
    %1914 = vmatprep.subr.mxu0 0.0
    %1915 = vmatpush2.msra.mxu0 0.0
    %1916 = vmatprep.mubr.f32.mxu0 0.0
    %1917 = vmatmul.mubr.f32.gmra.mxu0 %v1832
    %v1918 = vpop.f32.mrf.mxu0
    %v1919 = vadd.f32 0.0, %v1918
    %v1920 = vpop.f32.mrf.mxu0
    %v1921 = vadd.f32 0.0, %v1920
    %1922 = vdwg.mxu0
    %1923 = vmatprep.subr.mxu0 0.0
    %1924 = vmatpush1.msra.mxu0 0.0
    %1925 = vmatprep.subr.mxu0 0.0
    %1926 = vmatpush1.msra.mxu0 0.0
    %1927 = vmatprep.subr.mxu0 0.0
    %1928 = vmatpush1.msra.mxu0 0.0
    %1929 = vmatprep.subr.mxu0 0.0
    %1930 = vmatpush1.msra.mxu0 0.0
    %1931 = vmatprep.subr.mxu0 0.0
    %1932 = vmatpush1.msra.mxu0 0.0
    %1933 = vmatprep.subr.mxu0 0.0
    %1934 = vmatpush1.msra.mxu0 0.0
    %1935 = vmatprep.subr.mxu0 0.0
    %1936 = vmatpush1.msra.mxu0 0.0
    %1937 = vmatprep.subr.mxu0 0.0
    %1938 = vmatpush1.msra.mxu0 0.0
    %1939 = vmatprep.subr.mxu0 0.0
    %1940 = vmatpush1.msra.mxu0 0.0
    %1941 = vmatprep.subr.mxu0 0.0
    %1942 = vmatpush1.msra.mxu0 0.0
    %1943 = vmatprep.subr.mxu0 0.0
    %1944 = vmatpush1.msra.mxu0 0.0
    %1945 = vmatprep.subr.mxu0 0.0
    %1946 = vmatpush1.msra.mxu0 0.0
    %1947 = vmatprep.subr.mxu0 0.0
    %1948 = vmatpush1.msra.mxu0 0.0
    %1949 = vmatprep.subr.mxu0 0.0
    %1950 = vmatpush1.msra.mxu0 0.0
    %1951 = vmatprep.subr.mxu0 0.0
    %1952 = vmatpush1.msra.mxu0 0.0
    %1953 = vmatprep.subr.mxu0 %v1844
    %1954 = vmatpush1.msra.mxu0 %v1841
    %1955 = vmatprep.subr.mxu0 0.0
    %1956 = vmatpush2.msra.mxu0 0.0
    %1957 = vmatprep.subr.mxu0 0.0
    %1958 = vmatpush2.msra.mxu0 0.0
    %1959 = vmatprep.subr.mxu0 0.0
    %1960 = vmatpush2.msra.mxu0 0.0
    %1961 = vmatprep.subr.mxu0 0.0
    %1962 = vmatpush2.msra.mxu0 0.0
    %1963 = vmatprep.subr.mxu0 0.0
    %1964 = vmatpush2.msra.mxu0 0.0
    %1965 = vmatprep.subr.mxu0 0.0
    %1966 = vmatpush2.msra.mxu0 0.0
    %1967 = vmatprep.subr.mxu0 0.0
    %1968 = vmatpush2.msra.mxu0 0.0
    %1969 = vmatprep.subr.mxu0 0.0
    %1970 = vmatpush2.msra.mxu0 0.0
    %1971 = vmatprep.subr.mxu0 0.0
    %1972 = vmatpush2.msra.mxu0 0.0
    %1973 = vmatprep.subr.mxu0 0.0
    %1974 = vmatpush2.msra.mxu0 0.0
    %1975 = vmatprep.subr.mxu0 0.0
    %1976 = vmatpush2.msra.mxu0 0.0
    %1977 = vmatprep.subr.mxu0 0.0
    %1978 = vmatpush2.msra.mxu0 0.0
    %1979 = vmatprep.subr.mxu0 0.0
    %1980 = vmatpush2.msra.mxu0 0.0
    %1981 = vmatprep.subr.mxu0 0.0
    %1982 = vmatpush2.msra.mxu0 0.0
    %1983 = vmatprep.subr.mxu0 0.0
    %1984 = vmatpush2.msra.mxu0 0.0
    %1985 = vmatprep.subr.mxu0 0.0
    %1986 = vmatpush2.msra.mxu0 0.0
    %1987 = vmatprep.mubr.f32.mxu0 0.0
    %1988 = vmatmul.mubr.f32.gmra.mxu0 %v1832
    %v1989 = vpop.f32.mrf.mxu0
    %v1990 = vadd.f32 0.0, %v1989
    %v1991 = vpop.f32.mrf.mxu0
    %v1992 = vadd.f32 0.0, %v1991
    %1993 = vdwg.mxu0
    %1994 = vmatprep.subr.mxu0 0.0
    %1995 = vmatpush1.msra.mxu0 0.0
    %1996 = vmatprep.subr.mxu0 0.0
    %1997 = vmatpush1.msra.mxu0 0.0
    %1998 = vmatprep.subr.mxu0 0.0
    %1999 = vmatpush1.msra.mxu0 0.0
    %2000 = vmatprep.subr.mxu0 0.0
    %2001 = vmatpush1.msra.mxu0 0.0
    %2002 = vmatprep.subr.mxu0 0.0
    %2003 = vmatpush1.msra.mxu0 0.0
    %2004 = vmatprep.subr.mxu0 0.0
    %2005 = vmatpush1.msra.mxu0 0.0
    %2006 = vmatprep.subr.mxu0 0.0
    %2007 = vmatpush1.msra.mxu0 0.0
    %2008 = vmatprep.subr.mxu0 0.0
    %2009 = vmatpush1.msra.mxu0 0.0
    %2010 = vmatprep.subr.mxu0 0.0
    %2011 = vmatpush1.msra.mxu0 0.0
    %2012 = vmatprep.subr.mxu0 0.0
    %2013 = vmatpush1.msra.mxu0 0.0
    %2014 = vmatprep.subr.mxu0 0.0
    %2015 = vmatpush1.msra.mxu0 0.0
    %2016 = vmatprep.subr.mxu0 0.0
    %2017 = vmatpush1.msra.mxu0 0.0
    %2018 = vmatprep.subr.mxu0 0.0
    %2019 = vmatpush1.msra.mxu0 0.0
    %2020 = vmatprep.subr.mxu0 0.0
    %2021 = vmatpush1.msra.mxu0 0.0
    %2022 = vmatprep.subr.mxu0 0.0
    %2023 = vmatpush1.msra.mxu0 0.0
    %2024 = vmatprep.subr.mxu0 %v1850
    %2025 = vmatpush1.msra.mxu0 %v1847
    %2026 = vmatprep.subr.mxu0 0.0
    %2027 = vmatpush2.msra.mxu0 0.0
    %2028 = vmatprep.subr.mxu0 0.0
    %2029 = vmatpush2.msra.mxu0 0.0
    %2030 = vmatprep.subr.mxu0 0.0
    %2031 = vmatpush2.msra.mxu0 0.0
    %2032 = vmatprep.subr.mxu0 0.0
    %2033 = vmatpush2.msra.mxu0 0.0
    %2034 = vmatprep.subr.mxu0 0.0
    %2035 = vmatpush2.msra.mxu0 0.0
    %2036 = vmatprep.subr.mxu0 0.0
    %2037 = vmatpush2.msra.mxu0 0.0
    %2038 = vmatprep.subr.mxu0 0.0
    %2039 = vmatpush2.msra.mxu0 0.0
    %2040 = vmatprep.subr.mxu0 0.0
    %2041 = vmatpush2.msra.mxu0 0.0
    %2042 = vmatprep.subr.mxu0 0.0
    %2043 = vmatpush2.msra.mxu0 0.0
    %2044 = vmatprep.subr.mxu0 0.0
    %2045 = vmatpush2.msra.mxu0 0.0
    %2046 = vmatprep.subr.mxu0 0.0
    %2047 = vmatpush2.msra.mxu0 0.0
    %2048 = vmatprep.subr.mxu0 0.0
    %2049 = vmatpush2.msra.mxu0 0.0
    %2050 = vmatprep.subr.mxu0 0.0
    %2051 = vmatpush2.msra.mxu0 0.0
    %2052 = vmatprep.subr.mxu0 0.0
    %2053 = vmatpush2.msra.mxu0 0.0
    %2054 = vmatprep.subr.mxu0 0.0
    %2055 = vmatpush2.msra.mxu0 0.0
    %2056 = vmatprep.subr.mxu0 0.0
    %2057 = vmatpush2.msra.mxu0 0.0
    %2058 = vmatprep.mubr.f32.mxu0 0.0
    %2059 = vmatmul.mubr.f32.gmra.mxu0 %v1832
    %v2060 = vpop.f32.mrf.mxu0
    %v2061 = vadd.f32 0.0, %v2060
    %v2062 = vpop.f32.mrf.mxu0
    %v2063 = vadd.f32 0.0, %v2062
    %2064 = vdwg.mxu0
    %v2065 = vadd.f32 %v1805, %v1919
    %v2066 = vadd.f32 %v1806, %v1921
    %v2067 = vadd.f32 %v1807, %v1990
    %v2068 = vadd.f32 %v1808, %v1992
    %v2069 = vadd.f32 %v1809, %v2061
    %v2070 = vadd.f32 %v1810, %v2063
    %2071 = vrot.lane.b32.xlu0 %v12, 90
    %v2072 = vpop.permute.xlu0 %2071
    %2073 = vrot.lane.b32.xlu0 %v19, 90
    %v2074 = vpop.permute.xlu0 %2073
    %2075 = vrot.lane.b32.xlu0 %v13, 90
    %v2076 = vpop.permute.xlu0 %2075
    %2077 = vrot.lane.b32.xlu0 %v20, 90
    %v2078 = vpop.permute.xlu0 %2077
    %2079 = vrot.lane.b32.xlu0 %v14, 90
    %v2080 = vpop.permute.xlu0 %2079
    %2081 = vrot.lane.b32.xlu0 %v21, 90
    %v2082 = vpop.permute.xlu0 %2081
    %vm2083 = vcmp.lt.s32.totalorder %v38, 90
    %v2084 = vsel %vm2083, %v2080, %v2082
    %v2085 = vsel %vm2083, %v2078, %v2080
    %v2086 = vsel %vm2083, %v2076, %v2078
    %v2087 = vsel %vm2083, %v2074, %v2076
    %v2088 = vsel %vm2083, %v2072, %v2074
    %v2089 = vsel %vm2083, %v2082, %v2072
    %v2090 = vld [vmem:[%s1 + $0x40] sm:$0xff]
    %v2092 = vsel %vm47, %v2090, 0
    %v2095 = vsel %vm51, %v2088, 0
    %v2098 = vsel %vm51, %v2087, 0
    %v2101 = vsel %vm51, %v2086, 0
    %v2104 = vsel %vm51, %v2085, 0
    %v2107 = vsel %vm51, %v2084, 0
    %v2110 = vsel %vm51, %v2089, 0
    %2112 = vmatprep.subr.mxu0 0.0
    %2113 = vmatpush1.msra.mxu0 0.0
    %2114 = vmatprep.subr.mxu0 0.0
    %2115 = vmatpush1.msra.mxu0 0.0
    %2116 = vmatprep.subr.mxu0 0.0
    %2117 = vmatpush1.msra.mxu0 0.0
    %2118 = vmatprep.subr.mxu0 0.0
    %2119 = vmatpush1.msra.mxu0 0.0
    %2120 = vmatprep.subr.mxu0 0.0
    %2121 = vmatpush1.msra.mxu0 0.0
    %2122 = vmatprep.subr.mxu0 0.0
    %2123 = vmatpush1.msra.mxu0 0.0
    %2124 = vmatprep.subr.mxu0 0.0
    %2125 = vmatpush1.msra.mxu0 0.0
    %2126 = vmatprep.subr.mxu0 0.0
    %2127 = vmatpush1.msra.mxu0 0.0
    %2128 = vmatprep.subr.mxu0 0.0
    %2129 = vmatpush1.msra.mxu0 0.0
    %2130 = vmatprep.subr.mxu0 0.0
    %2131 = vmatpush1.msra.mxu0 0.0
    %2132 = vmatprep.subr.mxu0 0.0
    %2133 = vmatpush1.msra.mxu0 0.0
    %2134 = vmatprep.subr.mxu0 0.0
    %2135 = vmatpush1.msra.mxu0 0.0
    %2136 = vmatprep.subr.mxu0 0.0
    %2137 = vmatpush1.msra.mxu0 0.0
    %2138 = vmatprep.subr.mxu0 0.0
    %2139 = vmatpush1.msra.mxu0 0.0
    %2140 = vmatprep.subr.mxu0 0.0
    %2141 = vmatpush1.msra.mxu0 0.0
    %2142 = vmatprep.subr.mxu0 %v2098
    %2143 = vmatpush1.msra.mxu0 %v2095
    %2144 = vmatprep.subr.mxu0 0.0
    %2145 = vmatpush2.msra.mxu0 0.0
    %2146 = vmatprep.subr.mxu0 0.0
    %2147 = vmatpush2.msra.mxu0 0.0
    %2148 = vmatprep.subr.mxu0 0.0
    %2149 = vmatpush2.msra.mxu0 0.0
    %2150 = vmatprep.subr.mxu0 0.0
    %2151 = vmatpush2.msra.mxu0 0.0
    %2152 = vmatprep.subr.mxu0 0.0
    %2153 = vmatpush2.msra.mxu0 0.0
    %2154 = vmatprep.subr.mxu0 0.0
    %2155 = vmatpush2.msra.mxu0 0.0
    %2156 = vmatprep.subr.mxu0 0.0
    %2157 = vmatpush2.msra.mxu0 0.0
    %2158 = vmatprep.subr.mxu0 0.0
    %2159 = vmatpush2.msra.mxu0 0.0
    %2160 = vmatprep.subr.mxu0 0.0
    %2161 = vmatpush2.msra.mxu0 0.0
    %2162 = vmatprep.subr.mxu0 0.0
    %2163 = vmatpush2.msra.mxu0 0.0
    %2164 = vmatprep.subr.mxu0 0.0
    %2165 = vmatpush2.msra.mxu0 0.0
    %2166 = vmatprep.subr.mxu0 0.0
    %2167 = vmatpush2.msra.mxu0 0.0
    %2168 = vmatprep.subr.mxu0 0.0
    %2169 = vmatpush2.msra.mxu0 0.0
    %2170 = vmatprep.subr.mxu0 0.0
    %2171 = vmatpush2.msra.mxu0 0.0
    %2172 = vmatprep.subr.mxu0 0.0
    %2173 = vmatpush2.msra.mxu0 0.0
    %2174 = vmatprep.subr.mxu0 0.0
    %2175 = vmatpush2.msra.mxu0 0.0
    %2176 = vmatprep.mubr.f32.mxu0 0.0
    %2177 = vmatmul.mubr.f32.gmra.mxu0 %v2092
    %v2178 = vpop.f32.mrf.mxu0
    %v2179 = vadd.f32 0.0, %v2178
    %v2180 = vpop.f32.mrf.mxu0
    %v2181 = vadd.f32 0.0, %v2180
    %2182 = vdwg.mxu0
    %2183 = vmatprep.subr.mxu0 0.0
    %2184 = vmatpush1.msra.mxu0 0.0
    %2185 = vmatprep.subr.mxu0 0.0
    %2186 = vmatpush1.msra.mxu0 0.0
    %2187 = vmatprep.subr.mxu0 0.0
    %2188 = vmatpush1.msra.mxu0 0.0
    %2189 = vmatprep.subr.mxu0 0.0
    %2190 = vmatpush1.msra.mxu0 0.0
    %2191 = vmatprep.subr.mxu0 0.0
    %2192 = vmatpush1.msra.mxu0 0.0
    %2193 = vmatprep.subr.mxu0 0.0
    %2194 = vmatpush1.msra.mxu0 0.0
    %2195 = vmatprep.subr.mxu0 0.0
    %2196 = vmatpush1.msra.mxu0 0.0
    %2197 = vmatprep.subr.mxu0 0.0
    %2198 = vmatpush1.msra.mxu0 0.0
    %2199 = vmatprep.subr.mxu0 0.0
    %2200 = vmatpush1.msra.mxu0 0.0
    %2201 = vmatprep.subr.mxu0 0.0
    %2202 = vmatpush1.msra.mxu0 0.0
    %2203 = vmatprep.subr.mxu0 0.0
    %2204 = vmatpush1.msra.mxu0 0.0
    %2205 = vmatprep.subr.mxu0 0.0
    %2206 = vmatpush1.msra.mxu0 0.0
    %2207 = vmatprep.subr.mxu0 0.0
    %2208 = vmatpush1.msra.mxu0 0.0
    %2209 = vmatprep.subr.mxu0 0.0
    %2210 = vmatpush1.msra.mxu0 0.0
    %2211 = vmatprep.subr.mxu0 0.0
    %2212 = vmatpush1.msra.mxu0 0.0
    %2213 = vmatprep.subr.mxu0 %v2104
    %2214 = vmatpush1.msra.mxu0 %v2101
    %2215 = vmatprep.subr.mxu0 0.0
    %2216 = vmatpush2.msra.mxu0 0.0
    %2217 = vmatprep.subr.mxu0 0.0
    %2218 = vmatpush2.msra.mxu0 0.0
    %2219 = vmatprep.subr.mxu0 0.0
    %2220 = vmatpush2.msra.mxu0 0.0
    %2221 = vmatprep.subr.mxu0 0.0
    %2222 = vmatpush2.msra.mxu0 0.0
    %2223 = vmatprep.subr.mxu0 0.0
    %2224 = vmatpush2.msra.mxu0 0.0
    %2225 = vmatprep.subr.mxu0 0.0
    %2226 = vmatpush2.msra.mxu0 0.0
    %2227 = vmatprep.subr.mxu0 0.0
    %2228 = vmatpush2.msra.mxu0 0.0
    %2229 = vmatprep.subr.mxu0 0.0
    %2230 = vmatpush2.msra.mxu0 0.0
    %2231 = vmatprep.subr.mxu0 0.0
    %2232 = vmatpush2.msra.mxu0 0.0
    %2233 = vmatprep.subr.mxu0 0.0
    %2234 = vmatpush2.msra.mxu0 0.0
    %2235 = vmatprep.subr.mxu0 0.0
    %2236 = vmatpush2.msra.mxu0 0.0
    %2237 = vmatprep.subr.mxu0 0.0
    %2238 = vmatpush2.msra.mxu0 0.0
    %2239 = vmatprep.subr.mxu0 0.0
    %2240 = vmatpush2.msra.mxu0 0.0
    %2241 = vmatprep.subr.mxu0 0.0
    %2242 = vmatpush2.msra.mxu0 0.0
    %2243 = vmatprep.subr.mxu0 0.0
    %2244 = vmatpush2.msra.mxu0 0.0
    %2245 = vmatprep.subr.mxu0 0.0
    %2246 = vmatpush2.msra.mxu0 0.0
    %2247 = vmatprep.mubr.f32.mxu0 0.0
    %2248 = vmatmul.mubr.f32.gmra.mxu0 %v2092
    %v2249 = vpop.f32.mrf.mxu0
    %v2250 = vadd.f32 0.0, %v2249
    %v2251 = vpop.f32.mrf.mxu0
    %v2252 = vadd.f32 0.0, %v2251
    %2253 = vdwg.mxu0
    %2254 = vmatprep.subr.mxu0 0.0
    %2255 = vmatpush1.msra.mxu0 0.0
    %2256 = vmatprep.subr.mxu0 0.0
    %2257 = vmatpush1.msra.mxu0 0.0
    %2258 = vmatprep.subr.mxu0 0.0
    %2259 = vmatpush1.msra.mxu0 0.0
    %2260 = vmatprep.subr.mxu0 0.0
    %2261 = vmatpush1.msra.mxu0 0.0
    %2262 = vmatprep.subr.mxu0 0.0
    %2263 = vmatpush1.msra.mxu0 0.0
    %2264 = vmatprep.subr.mxu0 0.0
    %2265 = vmatpush1.msra.mxu0 0.0
    %2266 = vmatprep.subr.mxu0 0.0
    %2267 = vmatpush1.msra.mxu0 0.0
    %2268 = vmatprep.subr.mxu0 0.0
    %2269 = vmatpush1.msra.mxu0 0.0
    %2270 = vmatprep.subr.mxu0 0.0
    %2271 = vmatpush1.msra.mxu0 0.0
    %2272 = vmatprep.subr.mxu0 0.0
    %2273 = vmatpush1.msra.mxu0 0.0
    %2274 = vmatprep.subr.mxu0 0.0
    %2275 = vmatpush1.msra.mxu0 0.0
    %2276 = vmatprep.subr.mxu0 0.0
    %2277 = vmatpush1.msra.mxu0 0.0
    %2278 = vmatprep.subr.mxu0 0.0
    %2279 = vmatpush1.msra.mxu0 0.0
    %2280 = vmatprep.subr.mxu0 0.0
    %2281 = vmatpush1.msra.mxu0 0.0
    %2282 = vmatprep.subr.mxu0 0.0
    %2283 = vmatpush1.msra.mxu0 0.0
    %2284 = vmatprep.subr.mxu0 %v2110
    %2285 = vmatpush1.msra.mxu0 %v2107
    %2286 = vmatprep.subr.mxu0 0.0
    %2287 = vmatpush2.msra.mxu0 0.0
    %2288 = vmatprep.subr.mxu0 0.0
    %2289 = vmatpush2.msra.mxu0 0.0
    %2290 = vmatprep.subr.mxu0 0.0
    %2291 = vmatpush2.msra.mxu0 0.0
    %2292 = vmatprep.subr.mxu0 0.0
    %2293 = vmatpush2.msra.mxu0 0.0
    %2294 = vmatprep.subr.mxu0 0.0
    %2295 = vmatpush2.msra.mxu0 0.0
    %2296 = vmatprep.subr.mxu0 0.0
    %2297 = vmatpush2.msra.mxu0 0.0
    %2298 = vmatprep.subr.mxu0 0.0
    %2299 = vmatpush2.msra.mxu0 0.0
    %2300 = vmatprep.subr.mxu0 0.0
    %2301 = vmatpush2.msra.mxu0 0.0
    %2302 = vmatprep.subr.mxu0 0.0
    %2303 = vmatpush2.msra.mxu0 0.0
    %2304 = vmatprep.subr.mxu0 0.0
    %2305 = vmatpush2.msra.mxu0 0.0
    %2306 = vmatprep.subr.mxu0 0.0
    %2307 = vmatpush2.msra.mxu0 0.0
    %2308 = vmatprep.subr.mxu0 0.0
    %2309 = vmatpush2.msra.mxu0 0.0
    %2310 = vmatprep.subr.mxu0 0.0
    %2311 = vmatpush2.msra.mxu0 0.0
    %2312 = vmatprep.subr.mxu0 0.0
    %2313 = vmatpush2.msra.mxu0 0.0
    %2314 = vmatprep.subr.mxu0 0.0
    %2315 = vmatpush2.msra.mxu0 0.0
    %2316 = vmatprep.subr.mxu0 0.0
    %2317 = vmatpush2.msra.mxu0 0.0
    %2318 = vmatprep.mubr.f32.mxu0 0.0
    %2319 = vmatmul.mubr.f32.gmra.mxu0 %v2092
    %v2320 = vpop.f32.mrf.mxu0
    %v2321 = vadd.f32 0.0, %v2320
    %v2322 = vpop.f32.mrf.mxu0
    %v2323 = vadd.f32 0.0, %v2322
    %2324 = vdwg.mxu0
    %v2325 = vadd.f32 %v2065, %v2179
    %v2326 = vadd.f32 %v2066, %v2181
    %v2327 = vadd.f32 %v2067, %v2250
    %v2328 = vadd.f32 %v2068, %v2252
    %v2329 = vadd.f32 %v2069, %v2321
    %v2330 = vadd.f32 %v2070, %v2323
    %v2331 = vld [vmem:[%s1 + $0x48] sm:$0xff]
    %2333 = vset.pattern.permute.xlu0 0
    %2334 = vperm.xlu0 %2333, %v2331
    %v2335 = vpop.permute.xlu0 %2334
    %v2337 = vadd.f32 %v2325, %v2335
    %v2338 = vadd.f32 %v2326, %v2335
    %v2339 = vadd.f32 %v2327, %v2335
    %v2340 = vadd.f32 %v2328, %v2335
    %v2341 = vadd.f32 %v2329, %v2335
    %v2342 = vadd.f32 %v2330, %v2335
    %2343 = vst [vmem:[#allocation2] sm:$0xff] %v2337
    %2344 = vst [vmem:[#allocation2 + $0x8] sm:$0xff] %v2338
    %2345 = vst [vmem:[#allocation2 + $0x10] sm:$0xff] %v2339
    %2346 = vst [vmem:[#allocation2 + $0x18] sm:$0xff] %v2340
    %2347 = vst [vmem:[#allocation2 + $0x20] sm:$0xff] %v2341
    %2348 = vst [vmem:[#allocation2 + $0x28] sm:$0xff] %v2342
    // Predicated region
    $region10: #{tpu_custom_call.1} parent=1 // pred_check
      _
    $region11: #{tpu_custom_call.1} parent=1 // pred_check_branch
      %2350 = sbr.rel (0) target = $region13
    $region12: #{tpu_custom_call.1} parent=1 // pred_region
      %s2352 = ssub.s32 768, 768
      %2353 = vsyncadd [#allocation3], %s2352
      %s2355 = sshll.u32 [#allocation2], 4
      %s2356 = int_to_ptr.vmem [resolvable:$true] %s2355
      %2358 = dma.vmem_to_hbm [thread:$0]  %s2356, 768, %s2, [#allocation3]
    $region13: #{tpu_custom_call.1} parent=1 // pred_fallthru
      _
    // Predicated region
    $region14: #{tpu_custom_call.1} parent=1 // pred_check
      _
    $region15: #{tpu_custom_call.1} parent=1 // pred_check_branch
      %2360 = sbr.rel (0) target = $region17
    $region16: #{tpu_custom_call.1} parent=1 // pred_region
      %2361 = dma.done [#allocation3], 768
    $region17: #{tpu_custom_call.1} parent=1 // pred_fallthru
      _
    %2362 = vsyncpa [#allocation3], 1

</llo_original>
